<compile_context>
chip_gen: v7x
topology: tpu7x:2x2x1
jax: 0.10.0
libtpu: 0.0.40
codegen_flags: <defaults>
</compile_context>

<pallas_src>
import jax
import jax.numpy as jnp
from jax.experimental import pallas as pl
from jax.experimental.pallas import tpu as pltpu

IN_DIM = 28 * 28          # 784 (full-array last dim for the x block -> legal, lane-padded by Mosaic)
HID = 512
OUT = 10
OUT_PAD = 128             # lane-dense output tile
DEFAULT_MAX_TILE = 512    # good balance on v5e/v6e/v7x; raise via tile_b if desired


def _round_up(x, m):
    return (x + m - 1) // m * m


def _choose_batch_tiling(B, tile_b=None, max_tile=DEFAULT_MAX_TILE):
    """Pick (tb, B_pad): tb a multiple of 16, B_pad a multiple of tb,
    padding waste bounded, and >=2 grid steps when there is enough work."""
    cap = max_tile if tile_b is None else tile_b
    cap = max(16, _round_up(cap, 16))          # enforce bf16-friendly sublane multiple
    tb = min(cap, _round_up(B, 16))
    # Bound batch-padding waste to <= ~25% of the padded batch.
    while tb > 16:
        B_pad = _round_up(B, tb)
        if (B_pad - B) * 4 <= B_pad:
            break
        tb = max(16, _round_up(tb // 2, 16))
    # Prefer >=2 grid steps when there is enough work (v7x has 2 TensorCores).
    if _round_up(B, tb) == tb and B > 256:
        tb = max(16, _round_up((tb + 1) // 2, 16))
    B_pad = _round_up(B, tb)
    return tb, B_pad


def mlp_kernel(x_ref, w1_ref, b1_ref, w2_ref, b2_ref, w3_ref, b3_ref, o_ref):
    # x arrives as float32; cast to the weight compute dtype (bf16) for the MXU.
    x = x_ref[...].astype(w1_ref.dtype)
    # Layer 1: (tb, 784)bf16 @ (784, 512)bf16 -> f32 acc, +bias, ReLU
    h1 = jnp.dot(x, w1_ref[...], preferred_element_type=jnp.float32)
    h1 = jnp.maximum(h1 + b1_ref[...], 0.0)
    # Layer 2: (tb, 512) @ (512, 512) -> f32 acc, +bias, ReLU
    h2 = jnp.dot(h1.astype(w2_ref.dtype), w2_ref[...],
                 preferred_element_type=jnp.float32)
    h2 = jnp.maximum(h2 + b2_ref[...], 0.0)
    # Layer 3: (tb, 512) @ (512, 128) -> f32 acc, +bias (padded cols are zero)
    logits = jnp.dot(h2.astype(w3_ref.dtype), w3_ref[...],
                     preferred_element_type=jnp.float32)
    o_ref[...] = (logits + b3_ref[...]).astype(o_ref.dtype)


def prepare_params(params, compute_dtype=jnp.bfloat16):
    """Pad/cast weights & biases ONCE (call outside the per-step forward)."""
    w1, b1, w2, b2, w3, b3 = params
    w1p = w1.astype(compute_dtype)                                       # (784, 512)
    w2p = w2.astype(compute_dtype)                                       # (512, 512)
    w3p = jnp.pad(w3, ((0, 0), (0, OUT_PAD - OUT))).astype(compute_dtype)  # (512, 128)
    b1p = b1.reshape(1, HID).astype(jnp.float32)
    b2p = b2.reshape(1, HID).astype(jnp.float32)
    b3p = jnp.pad(b3.reshape(1, OUT), ((0, 0), (0, OUT_PAD - OUT))).astype(jnp.float32)
    return (w1p, b1p, w2p, b2p, w3p, b3p)


def neural_network_forward(x, prepared_params, *, tile_b=None):
    """x: (B, 1, 28, 28) float32 (NCHW, like the PyTorch module).
    prepared_params: output of prepare_params(). Returns logits (B, 10) float32."""
    w1p, b1p, w2p, b2p, w3p, b3p = prepared_params
    B = x.shape[0]

    # nn.Flatten(): (B, 784) — a free contiguous reshape, no extra HBM pass.
    x2d = x.reshape(B, -1)
    assert x2d.shape[1] == IN_DIM

    tb, B_pad = _choose_batch_tiling(B, tile_b)
    grid = (B_pad // tb,)

    # Only pad batch rows if needed; keep x in float32 (cast happens in-kernel).
    x_in = x2d if B_pad == B else jnp.pad(x2d, ((0, B_pad - B), (0, 0)))

    w_bytes = (IN_DIM * HID + HID * HID + HID * OUT_PAD) * jnp.dtype(w1p.dtype).itemsize
    flops = 2 * B_pad * (IN_DIM * HID + HID * HID + HID * OUT_PAD)
    bytes_accessed = (
        B_pad * IN_DIM * 4          # x (f32)
        + w_bytes                   # weights (bf16, resident)
        + (2 * HID + OUT_PAD) * 4   # biases (f32)
        + B_pad * OUT_PAD * 4       # output (f32)
    )

    out_pad = pl.pallas_call(
        mlp_kernel,
        out_shape=jax.ShapeDtypeStruct((B_pad, OUT_PAD), jnp.float32),
        grid_spec=pltpu.PrefetchScalarGridSpec(
            num_scalar_prefetch=0,
            grid=grid,
            in_specs=[
                pl.BlockSpec((tb, IN_DIM), lambda i: (i, 0)),      # x tile (f32)
                pl.BlockSpec((IN_DIM, HID), lambda i: (0, 0)),     # w1 (resident)
                pl.BlockSpec((1, HID), lambda i: (0, 0)),          # b1
                pl.BlockSpec((HID, HID), lambda i: (0, 0)),        # w2
                pl.BlockSpec((1, HID), lambda i: (0, 0)),          # b2
                pl.BlockSpec((HID, OUT_PAD), lambda i: (0, 0)),    # w3 (padded)
                pl.BlockSpec((1, OUT_PAD), lambda i: (0, 0)),      # b3 (padded)
            ],
            out_specs=pl.BlockSpec((tb, OUT_PAD), lambda i: (i, 0)),
        ),
        compiler_params=pltpu.CompilerParams(
            dimension_semantics=("parallel",),
            vmem_limit_bytes=32 * 1024 * 1024,
        ),
        cost_estimate=pl.CostEstimate(
            flops=flops, transcendentals=0, bytes_accessed=bytes_accessed),
    )(x_in, w1p, b1p, w2p, b2p, w3p, b3p)

    # Strip batch/output padding.
    return out_pad[:B, :OUT]


def init_params(key):
    """Deterministic init mimicking nn.Linear shapes; weights stored (in, out), f32."""
    k1, k2, k3, k4, k5, k6 = jax.random.split(key, 6)

    def lin(kw, kb, fan_in, fan_out):
        bound = 1.0 / jnp.sqrt(fan_in)
        w = jax.random.uniform(kw, (fan_in, fan_out), jnp.float32, -bound, bound)
        b = jax.random.uniform(kb, (1, fan_out), jnp.float32, -bound, bound)
        return w, b

    w1, b1 = lin(k1, k2, IN_DIM, HID)
    w2, b2 = lin(k3, k4, HID, HID)
    w3, b3 = lin(k5, k6, HID, OUT)
    return (w1, b1, w2, b2, w3, b3)


def reference_forward(x, params, compute_dtype=jnp.bfloat16):
    """Plain-JAX reference with the same bf16-matmul / f32-accumulate semantics."""
    w1, b1, w2, b2, w3, b3 = params
    h = x.reshape(x.shape[0], -1)
    h = jnp.dot(h.astype(compute_dtype), w1.astype(compute_dtype),
                preferred_element_type=jnp.float32) + b1
    h = jnp.maximum(h, 0.0)
    h = jnp.dot(h.astype(compute_dtype), w2.astype(compute_dtype),
                preferred_element_type=jnp.float32) + b2
    h = jnp.maximum(h, 0.0)
    return jnp.dot(h.astype(compute_dtype), w3.astype(compute_dtype),
                   preferred_element_type=jnp.float32) + b3


if __name__ == "__main__":
    key = jax.random.PRNGKey(0)
    kp, kx = jax.random.split(key)
    params = init_params(kp)
    prepared = prepare_params(params)   # pad/cast weights once, outside the forward

    B = 8
    x = jax.random.normal(kx, (B, 1, 28, 28), jnp.float32)  # NCHW, like MNIST

    logits = neural_network_forward(x, prepared)
    logits = jax.block_until_ready(logits)

    ref = reference_forward(x, params)
    assert logits.shape == (B, OUT)
    assert jnp.allclose(logits, ref, atol=1e-2, rtol=1e-2), (
        float(jnp.max(jnp.abs(logits - ref))))

    print("KERNEL_OK")
</pallas_src>

<mosaic_0001>
module attributes {stable_mosaic.version = 11 : i64} {
  func.func @mlp_kernel(%arg0: i32, %arg1: memref<16x784xf32, #tpu.memory_space<vmem>>, %arg2: memref<784x512xbf16, #tpu.memory_space<vmem>>, %arg3: memref<1x512xf32, #tpu.memory_space<vmem>>, %arg4: memref<512x512xbf16, #tpu.memory_space<vmem>>, %arg5: memref<1x512xf32, #tpu.memory_space<vmem>>, %arg6: memref<512x128xbf16, #tpu.memory_space<vmem>>, %arg7: memref<1x128xf32, #tpu.memory_space<vmem>>, %arg8: memref<16x128xf32, #tpu.memory_space<vmem>>) attributes {dimension_semantics = [#tpu.dimension_semantics<parallel>], iteration_bounds = array<i64: 1>, scalar_prefetch = 0 : i64, scratch_operands = 0 : i64, tpu.core_type = #tpu.core_type<tc>, window_params = [{transform_indices = @transform_0, window_bounds = array<i64: 16, 784>}, {pipeline_mode = #tpu.pipeline_mode<synchronous>, transform_indices = @transform_1, window_bounds = array<i64: 784, 512>}, {pipeline_mode = #tpu.pipeline_mode<synchronous>, transform_indices = @transform_2, window_bounds = array<i64: 1, 512>}, {pipeline_mode = #tpu.pipeline_mode<synchronous>, transform_indices = @transform_3, window_bounds = array<i64: 512, 512>}, {pipeline_mode = #tpu.pipeline_mode<synchronous>, transform_indices = @transform_4, window_bounds = array<i64: 1, 512>}, {pipeline_mode = #tpu.pipeline_mode<synchronous>, transform_indices = @transform_5, window_bounds = array<i64: 512, 128>}, {pipeline_mode = #tpu.pipeline_mode<synchronous>, transform_indices = @transform_6, window_bounds = array<i64: 1, 128>}, {transform_indices = @transform_7, window_bounds = array<i64: 16, 128>}]} {
    %c0 = arith.constant 0 : index
    %c0_0 = arith.constant 0 : index
    %0 = vector.load %arg1[%c0, %c0_0] : memref<16x784xf32, #tpu.memory_space<vmem>>, vector<16x784xf32>
    %1 = arith.truncf %0 : vector<16x784xf32> to vector<16x784xbf16>
    %c0_1 = arith.constant 0 : index
    %c0_2 = arith.constant 0 : index
    %2 = vector.load %arg2[%c0_1, %c0_2] : memref<784x512xbf16, #tpu.memory_space<vmem>>, vector<784x512xbf16>
    %cst = arith.constant dense<0.000000e+00> : vector<16x512xf32>
    %3 = tpu.matmul %1, %2, %cst {dimension_numbers = #tpu.dot_dimension_numbers<[1], [0], [0], [1], [0, 0, 1, 1], [], []>} : vector<16x784xbf16>, vector<784x512xbf16>, vector<16x512xf32> -> vector<16x512xf32>
    %c0_3 = arith.constant 0 : index
    %c0_4 = arith.constant 0 : index
    %4 = vector.load %arg3[%c0_3, %c0_4] : memref<1x512xf32, #tpu.memory_space<vmem>>, vector<1x512xf32>
    %5 = vector.broadcast %4 : vector<1x512xf32> to vector<16x512xf32>
    %6 = arith.addf %3, %5 : vector<16x512xf32>
    %cst_5 = arith.constant 0.000000e+00 : f32
    %7 = vector.broadcast %cst_5 : f32 to vector<16x512xf32>
    %8 = arith.maximumf %6, %7 : vector<16x512xf32>
    %9 = arith.truncf %8 : vector<16x512xf32> to vector<16x512xbf16>
    %c0_6 = arith.constant 0 : index
    %c0_7 = arith.constant 0 : index
    %10 = vector.load %arg4[%c0_6, %c0_7] : memref<512x512xbf16, #tpu.memory_space<vmem>>, vector<512x512xbf16>
    %cst_8 = arith.constant dense<0.000000e+00> : vector<16x512xf32>
    %11 = tpu.matmul %9, %10, %cst_8 {dimension_numbers = #tpu.dot_dimension_numbers<[1], [0], [0], [1], [0, 0, 1, 1], [], []>} : vector<16x512xbf16>, vector<512x512xbf16>, vector<16x512xf32> -> vector<16x512xf32>
    %c0_9 = arith.constant 0 : index
    %c0_10 = arith.constant 0 : index
    %12 = vector.load %arg5[%c0_9, %c0_10] : memref<1x512xf32, #tpu.memory_space<vmem>>, vector<1x512xf32>
    %13 = vector.broadcast %12 : vector<1x512xf32> to vector<16x512xf32>
    %14 = arith.addf %11, %13 : vector<16x512xf32>
    %cst_11 = arith.constant 0.000000e+00 : f32
    %15 = vector.broadcast %cst_11 : f32 to vector<16x512xf32>
    %16 = arith.maximumf %14, %15 : vector<16x512xf32>
    %17 = arith.truncf %16 : vector<16x512xf32> to vector<16x512xbf16>
    %c0_12 = arith.constant 0 : index
    %c0_13 = arith.constant 0 : index
    %18 = vector.load %arg6[%c0_12, %c0_13] : memref<512x128xbf16, #tpu.memory_space<vmem>>, vector<512x128xbf16>
    %cst_14 = arith.constant dense<0.000000e+00> : vector<16x128xf32>
    %19 = tpu.matmul %17, %18, %cst_14 {dimension_numbers = #tpu.dot_dimension_numbers<[1], [0], [0], [1], [0, 0, 1, 1], [], []>} : vector<16x512xbf16>, vector<512x128xbf16>, vector<16x128xf32> -> vector<16x128xf32>
    %c0_15 = arith.constant 0 : index
    %c0_16 = arith.constant 0 : index
    %20 = vector.load %arg7[%c0_15, %c0_16] : memref<1x128xf32, #tpu.memory_space<vmem>>, vector<1x128xf32>
    %21 = vector.broadcast %20 : vector<1x128xf32> to vector<16x128xf32>
    %22 = arith.addf %19, %21 : vector<16x128xf32>
    %c0_17 = arith.constant 0 : index
    %c0_18 = arith.constant 0 : index
    %23 = vector.load %arg8[%c0_17, %c0_18] : memref<16x128xf32, #tpu.memory_space<vmem>>, vector<16x128xf32>
    tpu.vector_store %arg8[%c0_17, %c0_18], %22 {strides = array<i32>} : memref<16x128xf32, #tpu.memory_space<vmem>>, vector<16x128xf32>,
    return
  }
  func.func @transform_0(%arg0: i32) -> (i32, i32) {
    %c0_i32 = arith.constant 0 : i32
    %c0_i32_0 = arith.constant 0 : i32
    return %arg0, %c0_i32 : i32, i32
  }
  func.func @transform_1(%arg0: i32) -> (i32, i32) {
    %c0_i32 = arith.constant 0 : i32
    %c0_i32_0 = arith.constant 0 : i32
    %c0_i32_1 = arith.constant 0 : i32
    return %c0_i32, %c0_i32_0 : i32, i32
  }
  func.func @transform_2(%arg0: i32) -> (i32, i32) {
    %c0_i32 = arith.constant 0 : i32
    %c0_i32_0 = arith.constant 0 : i32
    %c0_i32_1 = arith.constant 0 : i32
    return %c0_i32, %c0_i32_0 : i32, i32
  }
  func.func @transform_3(%arg0: i32) -> (i32, i32) {
    %c0_i32 = arith.constant 0 : i32
    %c0_i32_0 = arith.constant 0 : i32
    %c0_i32_1 = arith.constant 0 : i32
    return %c0_i32, %c0_i32_0 : i32, i32
  }
  func.func @transform_4(%arg0: i32) -> (i32, i32) {
    %c0_i32 = arith.constant 0 : i32
    %c0_i32_0 = arith.constant 0 : i32
    %c0_i32_1 = arith.constant 0 : i32
    return %c0_i32, %c0_i32_0 : i32, i32
  }
  func.func @transform_5(%arg0: i32) -> (i32, i32) {
    %c0_i32 = arith.constant 0 : i32
    %c0_i32_0 = arith.constant 0 : i32
    %c0_i32_1 = arith.constant 0 : i32
    return %c0_i32, %c0_i32_0 : i32, i32
  }
  func.func @transform_6(%arg0: i32) -> (i32, i32) {
    %c0_i32 = arith.constant 0 : i32
    %c0_i32_0 = arith.constant 0 : i32
    %c0_i32_1 = arith.constant 0 : i32
    return %c0_i32, %c0_i32_0 : i32, i32
  }
  func.func @transform_7(%arg0: i32) -> (i32, i32) {
    %c0_i32 = arith.constant 0 : i32
    %c0_i32_0 = arith.constant 0 : i32
    return %arg0, %c0_i32 : i32, i32
  }
}

</mosaic_0001>

<llo_original>
// kernel: tpu_custom_call.1
$region0: #{tpu_custom_call.1}
  #allocation0 [shape = 'u32[]', space=smem, size = 0x4, offset = 0x4, fixed_abs, tag = 'smem constant byte address 0x4 - core index']
  #allocation1 [shape = 'u32[144,128]{1,0:T(1,128)}', space=vmem, size = 0x12000, scoped, tag = 'internal scratch']
  %s0 = inlined_call_operand.hbm [shape: f32[16,784], index: 0, kind: input, shape index: {}]
  %s1 = inlined_call_operand.hbm [shape: bf16[784,512], index: 1, kind: input, shape index: {}]
  %s2 = inlined_call_operand.vmem [shape: f32[1,512], index: 2, kind: input, shape index: {}]
  %s3 = inlined_call_operand.hbm [shape: bf16[512,512], index: 3, kind: input, shape index: {}]
  %s4 = inlined_call_operand.vmem [shape: f32[1,512], index: 4, kind: input, shape index: {}]
  %s5 = inlined_call_operand.hbm [shape: bf16[512,128], index: 5, kind: input, shape index: {}]
  %s6 = inlined_call_operand.vmem [shape: f32[1,128], index: 6, kind: input, shape index: {}]
  %s7 = inlined_call_operand.hbm [shape: f32[16,128], index: 7, kind: output, shape index: {}]
  %s8 = sld [smem:[#allocation0]]
  $region54: #{tpu_custom_call.1} parent=0
    _
  %s10 = ssub.s32 1, %s8
  %s11 = scalar_select 0, %s10, %s8
  $region1: #{tpu_custom_call.1} parent=0
    #allocation2 [shape = 'u8[57344]{0}', space=vmem, size = 0xe000, scoped, tag = 'input window, operand 0, single buffered']
    #allocation3 [shape = 's32[1]{0}', space=sflag, size = 0x4, scoped, tag = 'scoped memory for tpu_custom_call.1']
    #allocation4 [shape = 's32[1]{0}', space=sflag, size = 0x4, scoped, tag = 'scoped memory for tpu_custom_call.1']
    #allocation5 [shape = 'u8[802816]{0}', space=vmem, size = 0xc4000, scoped, tag = 'input window, operand 1, single buffered']
    #allocation6 [shape = 's32[1]{0}', space=sflag, size = 0x4, scoped, tag = 'scoped memory for tpu_custom_call.1']
    #allocation7 [shape = 'u8[524288]{0}', space=vmem, size = 0x80000, scoped, tag = 'input window, operand 3, single buffered']
    #allocation8 [shape = 'u8[131072]{0}', space=vmem, size = 0x20000, scoped, tag = 'input window, operand 5, single buffered']
    #allocation9 [shape = 's32[1]{0}', space=sflag, size = 0x4, scoped, tag = 'scoped memory for tpu_custom_call.1']
    #allocation10 [shape = 'u8[8192]{0}', space=vmem, size = 0x2000, scoped, tag = 'output window, operand 0, single buffered']
    %12 = vsyncpa [#allocation3], 0
    %13 = vsyncpa [#allocation6], 0
    %14 = vsyncpa [#allocation9], 0
    %15 = vsyncpa [#allocation4], 0
    // Predicated region
    $region2: #{tpu_custom_call.1} parent=1 // pred_check
      _
    $region3: #{tpu_custom_call.1} parent=1 // pred_check_branch
      %17 = sbr.rel (0) target = $region5
    $region4: #{tpu_custom_call.1} parent=1 // pred_region
      %s19 = ssub.s32 1792, 1792
      %20 = vsyncadd [#allocation3], %s19
      %s21 = sshll.u32 [#allocation2], 4
      %s22 = int_to_ptr.vmem [resolvable:$true] %s21
      %27 = dma.hbm_to_vmem [thread:$0]  %s0, 1792, %s22, [#allocation3], 896, 896, 56
    $region5: #{tpu_custom_call.1} parent=1 // pred_fallthru
      _
    // Predicated region
    $region6: #{tpu_custom_call.1} parent=1 // pred_check
      _
    $region7: #{tpu_custom_call.1} parent=1 // pred_check_branch
      %29 = sbr.rel (0) target = $region9
    $region8: #{tpu_custom_call.1} parent=1 // pred_region
      %s31 = ssub.s32 25088, 25088
      %32 = vsyncadd [#allocation6], %s31
      %s33 = sshll.u32 [#allocation5], 4
      %s34 = int_to_ptr.vmem [resolvable:$true] %s33
      %39 = dma.hbm_to_vmem [thread:$0]  %s1, 25088, %s34, [#allocation6], 256, 256, 16
    $region9: #{tpu_custom_call.1} parent=1 // pred_fallthru
      _
    // Predicated region
    $region10: #{tpu_custom_call.1} parent=1 // pred_check
      _
    $region11: #{tpu_custom_call.1} parent=1 // pred_check_branch
      %41 = sbr.rel (0) target = $region13
    $region12: #{tpu_custom_call.1} parent=1 // pred_region
      _
    $region13: #{tpu_custom_call.1} parent=1 // pred_fallthru
      _
    // Predicated region
    $region14: #{tpu_custom_call.1} parent=1 // pred_check
      _
    $region15: #{tpu_custom_call.1} parent=1 // pred_check_branch
      %43 = sbr.rel (0) target = $region17
    $region16: #{tpu_custom_call.1} parent=1 // pred_region
      %s45 = ssub.s32 16384, 16384
      %46 = vsyncadd [#allocation6], %s45
      %s47 = sshll.u32 [#allocation7], 4
      %s48 = int_to_ptr.vmem [resolvable:$true] %s47
      %53 = dma.hbm_to_vmem [thread:$0]  %s3, 16384, %s48, [#allocation6], 256, 256, 16
    $region17: #{tpu_custom_call.1} parent=1 // pred_fallthru
      _
    // Predicated region
    $region18: #{tpu_custom_call.1} parent=1 // pred_check
      _
    $region19: #{tpu_custom_call.1} parent=1 // pred_check_branch
      %55 = sbr.rel (0) target = $region21
    $region20: #{tpu_custom_call.1} parent=1 // pred_region
      _
    $region21: #{tpu_custom_call.1} parent=1 // pred_fallthru
      _
    // Predicated region
    $region22: #{tpu_custom_call.1} parent=1 // pred_check
      _
    $region23: #{tpu_custom_call.1} parent=1 // pred_check_branch
      %57 = sbr.rel (0) target = $region25
    $region24: #{tpu_custom_call.1} parent=1 // pred_region
      %s59 = ssub.s32 4096, 4096
      %60 = vsyncadd [#allocation9], %s59
      %s61 = sshll.u32 [#allocation8], 4
      %s62 = int_to_ptr.vmem [resolvable:$true] %s61
      %67 = dma.hbm_to_vmem [thread:$0]  %s5, 4096, %s62, [#allocation9], 64, 64, 4
    $region25: #{tpu_custom_call.1} parent=1 // pred_fallthru
      _
    // Predicated region
    $region26: #{tpu_custom_call.1} parent=1 // pred_check
      _
    $region27: #{tpu_custom_call.1} parent=1 // pred_check_branch
      %69 = sbr.rel (0) target = $region29
    $region28: #{tpu_custom_call.1} parent=1 // pred_region
      _
    $region29: #{tpu_custom_call.1} parent=1 // pred_fallthru
      _
    // Predicated region
    $region30: #{tpu_custom_call.1} parent=1 // pred_check
      _
    $region31: #{tpu_custom_call.1} parent=1 // pred_check_branch
      %71 = sbr.rel (0) target = $region33
    $region32: #{tpu_custom_call.1} parent=1 // pred_region
      %72 = dma.done [#allocation3], 1792
    $region33: #{tpu_custom_call.1} parent=1 // pred_fallthru
      _
    // Predicated region
    $region34: #{tpu_custom_call.1} parent=1 // pred_check
      _
    $region35: #{tpu_custom_call.1} parent=1 // pred_check_branch
      %74 = sbr.rel (0) target = $region37
    $region36: #{tpu_custom_call.1} parent=1 // pred_region
      %75 = dma.done [#allocation6], 25088
    $region37: #{tpu_custom_call.1} parent=1 // pred_fallthru
      _
    // Predicated region
    $region38: #{tpu_custom_call.1} parent=1 // pred_check
      _
    $region39: #{tpu_custom_call.1} parent=1 // pred_check_branch
      %77 = sbr.rel (0) target = $region41
    $region40: #{tpu_custom_call.1} parent=1 // pred_region
      %78 = dma.done [#allocation6], 16384
    $region41: #{tpu_custom_call.1} parent=1 // pred_fallthru
      _
    // Predicated region
    $region42: #{tpu_custom_call.1} parent=1 // pred_check
      _
    $region43: #{tpu_custom_call.1} parent=1 // pred_check_branch
      %80 = sbr.rel (0) target = $region45
    $region44: #{tpu_custom_call.1} parent=1 // pred_region
      %81 = dma.done [#allocation9], 4096
    $region45: #{tpu_custom_call.1} parent=1 // pred_fallthru
      _
    %v83 = vld [vmem:[#allocation2] sm:$0xff]
    %v84 = vld [vmem:[#allocation2 + $0x8] sm:$0xff]
    %v85 = vld [vmem:[#allocation2 + $0x10] sm:$0xff]
    %v86 = vld [vmem:[#allocation2 + $0x18] sm:$0xff]
    %v87 = vld [vmem:[#allocation2 + $0x20] sm:$0xff]
    %v88 = vld [vmem:[#allocation2 + $0x28] sm:$0xff]
    %v89 = vld [vmem:[#allocation2 + $0x30] sm:$0xff]
    %v90 = vld [vmem:[#allocation2 + $0x38] sm:$0xff]
    %v91 = vld [vmem:[#allocation2 + $0x40] sm:$0xff]
    %v92 = vld [vmem:[#allocation2 + $0x48] sm:$0xff]
    %v93 = vld [vmem:[#allocation2 + $0x50] sm:$0xff]
    %v94 = vld [vmem:[#allocation2 + $0x58] sm:$0xff]
    %v95 = vld [vmem:[#allocation2 + $0x60] sm:$0xff]
    %v96 = vld [vmem:[#allocation2 + $0x68] sm:$0xff]
    %v97 = vpack.c.bf16 %v90, %v83
    %v98 = vpack.c.bf16 %v91, %v84
    %v99 = vpack.c.bf16 %v92, %v85
    %v100 = vpack.c.bf16 %v93, %v86
    %v101 = vpack.c.bf16 %v94, %v87
    %v102 = vpack.c.bf16 %v95, %v88
    %v103 = vpack.c.bf16 %v96, %v89
    %v104 = vld [vmem:[#allocation5] sm:$0xff]
    %v105 = vld [vmem:[#allocation5 + $0x8] sm:$0xff]
    %v106 = vld [vmem:[#allocation5 + $0x10] sm:$0xff]
    %v107 = vld [vmem:[#allocation5 + $0x18] sm:$0xff]
    %v108 = vld [vmem:[#allocation5 + $0x20] sm:$0xff]
    %v109 = vld [vmem:[#allocation5 + $0x28] sm:$0xff]
    %v110 = vld [vmem:[#allocation5 + $0x30] sm:$0xff]
    %v111 = vld [vmem:[#allocation5 + $0x38] sm:$0xff]
    %v112 = vld [vmem:[#allocation5 + $0x40] sm:$0xff]
    %v113 = vld [vmem:[#allocation5 + $0x48] sm:$0xff]
    %v114 = vld [vmem:[#allocation5 + $0x50] sm:$0xff]
    %v115 = vld [vmem:[#allocation5 + $0x58] sm:$0xff]
    %v116 = vld [vmem:[#allocation5 + $0x60] sm:$0xff]
    %v117 = vld [vmem:[#allocation5 + $0x68] sm:$0xff]
    %v118 = vld [vmem:[#allocation5 + $0x70] sm:$0xff]
    %v119 = vld [vmem:[#allocation5 + $0x78] sm:$0xff]
    %v120 = vld [vmem:[#allocation5 + $0x80] sm:$0xff]
    %v121 = vld [vmem:[#allocation5 + $0x88] sm:$0xff]
    %v122 = vld [vmem:[#allocation5 + $0x90] sm:$0xff]
    %v123 = vld [vmem:[#allocation5 + $0x98] sm:$0xff]
    %v124 = vld [vmem:[#allocation5 + $0xa0] sm:$0xff]
    %v125 = vld [vmem:[#allocation5 + $0xa8] sm:$0xff]
    %v126 = vld [vmem:[#allocation5 + $0xb0] sm:$0xff]
    %v127 = vld [vmem:[#allocation5 + $0xb8] sm:$0xff]
    %v128 = vld [vmem:[#allocation5 + $0xc0] sm:$0xff]
    %v129 = vld [vmem:[#allocation5 + $0xc8] sm:$0xff]
    %v130 = vld [vmem:[#allocation5 + $0xd0] sm:$0xff]
    %v131 = vld [vmem:[#allocation5 + $0xd8] sm:$0xff]
    %v132 = vld [vmem:[#allocation5 + $0xe0] sm:$0xff]
    %v133 = vld [vmem:[#allocation5 + $0xe8] sm:$0xff]
    %v134 = vld [vmem:[#allocation5 + $0xf0] sm:$0xff]
    %v135 = vld [vmem:[#allocation5 + $0xf8] sm:$0xff]
    %v136 = vld [vmem:[#allocation5 + $0x100] sm:$0xff]
    %v137 = vld [vmem:[#allocation5 + $0x108] sm:$0xff]
    %v138 = vld [vmem:[#allocation5 + $0x110] sm:$0xff]
    %v139 = vld [vmem:[#allocation5 + $0x118] sm:$0xff]
    %v140 = vld [vmem:[#allocation5 + $0x120] sm:$0xff]
    %v141 = vld [vmem:[#allocation5 + $0x128] sm:$0xff]
    %v142 = vld [vmem:[#allocation5 + $0x130] sm:$0xff]
    %v143 = vld [vmem:[#allocation5 + $0x138] sm:$0xff]
    %v144 = vld [vmem:[#allocation5 + $0x140] sm:$0xff]
    %v145 = vld [vmem:[#allocation5 + $0x148] sm:$0xff]
    %v146 = vld [vmem:[#allocation5 + $0x150] sm:$0xff]
    %v147 = vld [vmem:[#allocation5 + $0x158] sm:$0xff]
    %v148 = vld [vmem:[#allocation5 + $0x160] sm:$0xff]
    %v149 = vld [vmem:[#allocation5 + $0x168] sm:$0xff]
    %v150 = vld [vmem:[#allocation5 + $0x170] sm:$0xff]
    %v151 = vld [vmem:[#allocation5 + $0x178] sm:$0xff]
    %v152 = vld [vmem:[#allocation5 + $0x180] sm:$0xff]
    %v153 = vld [vmem:[#allocation5 + $0x188] sm:$0xff]
    %v154 = vld [vmem:[#allocation5 + $0x190] sm:$0xff]
    %v155 = vld [vmem:[#allocation5 + $0x198] sm:$0xff]
    %v156 = vld [vmem:[#allocation5 + $0x1a0] sm:$0xff]
    %v157 = vld [vmem:[#allocation5 + $0x1a8] sm:$0xff]
    %v158 = vld [vmem:[#allocation5 + $0x1b0] sm:$0xff]
    %v159 = vld [vmem:[#allocation5 + $0x1b8] sm:$0xff]
    %v160 = vld [vmem:[#allocation5 + $0x1c0] sm:$0xff]
    %v161 = vld [vmem:[#allocation5 + $0x1c8] sm:$0xff]
    %v162 = vld [vmem:[#allocation5 + $0x1d0] sm:$0xff]
    %v163 = vld [vmem:[#allocation5 + $0x1d8] sm:$0xff]
    %v164 = vld [vmem:[#allocation5 + $0x1e0] sm:$0xff]
    %v165 = vld [vmem:[#allocation5 + $0x1e8] sm:$0xff]
    %v166 = vld [vmem:[#allocation5 + $0x1f0] sm:$0xff]
    %v167 = vld [vmem:[#allocation5 + $0x1f8] sm:$0xff]
    %v168 = vld [vmem:[#allocation5 + $0x200] sm:$0xff]
    %v169 = vld [vmem:[#allocation5 + $0x208] sm:$0xff]
    %v170 = vld [vmem:[#allocation5 + $0x210] sm:$0xff]
    %v171 = vld [vmem:[#allocation5 + $0x218] sm:$0xff]
    %v172 = vld [vmem:[#allocation5 + $0x220] sm:$0xff]
    %v173 = vld [vmem:[#allocation5 + $0x228] sm:$0xff]
    %v174 = vld [vmem:[#allocation5 + $0x230] sm:$0xff]
    %v175 = vld [vmem:[#allocation5 + $0x238] sm:$0xff]
    %v176 = vld [vmem:[#allocation5 + $0x240] sm:$0xff]
    %v177 = vld [vmem:[#allocation5 + $0x248] sm:$0xff]
    %v178 = vld [vmem:[#allocation5 + $0x250] sm:$0xff]
    %v179 = vld [vmem:[#allocation5 + $0x258] sm:$0xff]
    %v180 = vld [vmem:[#allocation5 + $0x260] sm:$0xff]
    %v181 = vld [vmem:[#allocation5 + $0x268] sm:$0xff]
    %v182 = vld [vmem:[#allocation5 + $0x270] sm:$0xff]
    %v183 = vld [vmem:[#allocation5 + $0x278] sm:$0xff]
    %v184 = vld [vmem:[#allocation5 + $0x280] sm:$0xff]
    %v185 = vld [vmem:[#allocation5 + $0x288] sm:$0xff]
    %v186 = vld [vmem:[#allocation5 + $0x290] sm:$0xff]
    %v187 = vld [vmem:[#allocation5 + $0x298] sm:$0xff]
    %v188 = vld [vmem:[#allocation5 + $0x2a0] sm:$0xff]
    %v189 = vld [vmem:[#allocation5 + $0x2a8] sm:$0xff]
    %v190 = vld [vmem:[#allocation5 + $0x2b0] sm:$0xff]
    %v191 = vld [vmem:[#allocation5 + $0x2b8] sm:$0xff]
    %v192 = vld [vmem:[#allocation5 + $0x2c0] sm:$0xff]
    %v193 = vld [vmem:[#allocation5 + $0x2c8] sm:$0xff]
    %v194 = vld [vmem:[#allocation5 + $0x2d0] sm:$0xff]
    %v195 = vld [vmem:[#allocation5 + $0x2d8] sm:$0xff]
    %v196 = vld [vmem:[#allocation5 + $0x2e0] sm:$0xff]
    %v197 = vld [vmem:[#allocation5 + $0x2e8] sm:$0xff]
    %v198 = vld [vmem:[#allocation5 + $0x2f0] sm:$0xff]
    %v199 = vld [vmem:[#allocation5 + $0x2f8] sm:$0xff]
    %v200 = vld [vmem:[#allocation5 + $0x300] sm:$0xff]
    %v201 = vld [vmem:[#allocation5 + $0x308] sm:$0xff]
    %v202 = vld [vmem:[#allocation5 + $0x310] sm:$0xff]
    %v203 = vld [vmem:[#allocation5 + $0x318] sm:$0xff]
    %v204 = vld [vmem:[#allocation5 + $0x320] sm:$0xff]
    %v205 = vld [vmem:[#allocation5 + $0x328] sm:$0xff]
    %v206 = vld [vmem:[#allocation5 + $0x330] sm:$0xff]
    %v207 = vld [vmem:[#allocation5 + $0x338] sm:$0xff]
    %v208 = vld [vmem:[#allocation5 + $0x340] sm:$0xff]
    %v209 = vld [vmem:[#allocation5 + $0x348] sm:$0xff]
    %v210 = vld [vmem:[#allocation5 + $0x350] sm:$0xff]
    %v211 = vld [vmem:[#allocation5 + $0x358] sm:$0xff]
    %v212 = vld [vmem:[#allocation5 + $0x360] sm:$0xff]
    %v213 = vld [vmem:[#allocation5 + $0x368] sm:$0xff]
    %v214 = vld [vmem:[#allocation5 + $0x370] sm:$0xff]
    %v215 = vld [vmem:[#allocation5 + $0x378] sm:$0xff]
    %v216 = vld [vmem:[#allocation5 + $0x380] sm:$0xff]
    %v217 = vld [vmem:[#allocation5 + $0x388] sm:$0xff]
    %v218 = vld [vmem:[#allocation5 + $0x390] sm:$0xff]
    %v219 = vld [vmem:[#allocation5 + $0x398] sm:$0xff]
    %v220 = vld [vmem:[#allocation5 + $0x3a0] sm:$0xff]
    %v221 = vld [vmem:[#allocation5 + $0x3a8] sm:$0xff]
    %v222 = vld [vmem:[#allocation5 + $0x3b0] sm:$0xff]
    %v223 = vld [vmem:[#allocation5 + $0x3b8] sm:$0xff]
    %v224 = vld [vmem:[#allocation5 + $0x3c0] sm:$0xff]
    %v225 = vld [vmem:[#allocation5 + $0x3c8] sm:$0xff]
    %v226 = vld [vmem:[#allocation5 + $0x3d0] sm:$0xff]
    %v227 = vld [vmem:[#allocation5 + $0x3d8] sm:$0xff]
    %v228 = vld [vmem:[#allocation5 + $0x3e0] sm:$0xff]
    %v229 = vld [vmem:[#allocation5 + $0x3e8] sm:$0xff]
    %v230 = vld [vmem:[#allocation5 + $0x3f0] sm:$0xff]
    %v231 = vld [vmem:[#allocation5 + $0x3f8] sm:$0xff]
    %v232 = vld [vmem:[#allocation5 + $0x400] sm:$0xff]
    %v233 = vld [vmem:[#allocation5 + $0x408] sm:$0xff]
    %v234 = vld [vmem:[#allocation5 + $0x410] sm:$0xff]
    %v235 = vld [vmem:[#allocation5 + $0x418] sm:$0xff]
    %v236 = vld [vmem:[#allocation5 + $0x420] sm:$0xff]
    %v237 = vld [vmem:[#allocation5 + $0x428] sm:$0xff]
    %v238 = vld [vmem:[#allocation5 + $0x430] sm:$0xff]
    %v239 = vld [vmem:[#allocation5 + $0x438] sm:$0xff]
    %v240 = vld [vmem:[#allocation5 + $0x440] sm:$0xff]
    %v241 = vld [vmem:[#allocation5 + $0x448] sm:$0xff]
    %v242 = vld [vmem:[#allocation5 + $0x450] sm:$0xff]
    %v243 = vld [vmem:[#allocation5 + $0x458] sm:$0xff]
    %v244 = vld [vmem:[#allocation5 + $0x460] sm:$0xff]
    %v245 = vld [vmem:[#allocation5 + $0x468] sm:$0xff]
    %v246 = vld [vmem:[#allocation5 + $0x470] sm:$0xff]
    %v247 = vld [vmem:[#allocation5 + $0x478] sm:$0xff]
    %v248 = vld [vmem:[#allocation5 + $0x480] sm:$0xff]
    %v249 = vld [vmem:[#allocation5 + $0x488] sm:$0xff]
    %v250 = vld [vmem:[#allocation5 + $0x490] sm:$0xff]
    %v251 = vld [vmem:[#allocation5 + $0x498] sm:$0xff]
    %v252 = vld [vmem:[#allocation5 + $0x4a0] sm:$0xff]
    %v253 = vld [vmem:[#allocation5 + $0x4a8] sm:$0xff]
    %v254 = vld [vmem:[#allocation5 + $0x4b0] sm:$0xff]
    %v255 = vld [vmem:[#allocation5 + $0x4b8] sm:$0xff]
    %v256 = vld [vmem:[#allocation5 + $0x4c0] sm:$0xff]
    %v257 = vld [vmem:[#allocation5 + $0x4c8] sm:$0xff]
    %v258 = vld [vmem:[#allocation5 + $0x4d0] sm:$0xff]
    %v259 = vld [vmem:[#allocation5 + $0x4d8] sm:$0xff]
    %v260 = vld [vmem:[#allocation5 + $0x4e0] sm:$0xff]
    %v261 = vld [vmem:[#allocation5 + $0x4e8] sm:$0xff]
    %v262 = vld [vmem:[#allocation5 + $0x4f0] sm:$0xff]
    %v263 = vld [vmem:[#allocation5 + $0x4f8] sm:$0xff]
    %v264 = vld [vmem:[#allocation5 + $0x500] sm:$0xff]
    %v265 = vld [vmem:[#allocation5 + $0x508] sm:$0xff]
    %v266 = vld [vmem:[#allocation5 + $0x510] sm:$0xff]
    %v267 = vld [vmem:[#allocation5 + $0x518] sm:$0xff]
    %v268 = vld [vmem:[#allocation5 + $0x520] sm:$0xff]
    %v269 = vld [vmem:[#allocation5 + $0x528] sm:$0xff]
    %v270 = vld [vmem:[#allocation5 + $0x530] sm:$0xff]
    %v271 = vld [vmem:[#allocation5 + $0x538] sm:$0xff]
    %v272 = vld [vmem:[#allocation5 + $0x540] sm:$0xff]
    %v273 = vld [vmem:[#allocation5 + $0x548] sm:$0xff]
    %v274 = vld [vmem:[#allocation5 + $0x550] sm:$0xff]
    %v275 = vld [vmem:[#allocation5 + $0x558] sm:$0xff]
    %v276 = vld [vmem:[#allocation5 + $0x560] sm:$0xff]
    %v277 = vld [vmem:[#allocation5 + $0x568] sm:$0xff]
    %v278 = vld [vmem:[#allocation5 + $0x570] sm:$0xff]
    %v279 = vld [vmem:[#allocation5 + $0x578] sm:$0xff]
    %v280 = vld [vmem:[#allocation5 + $0x580] sm:$0xff]
    %v281 = vld [vmem:[#allocation5 + $0x588] sm:$0xff]
    %v282 = vld [vmem:[#allocation5 + $0x590] sm:$0xff]
    %v283 = vld [vmem:[#allocation5 + $0x598] sm:$0xff]
    %v284 = vld [vmem:[#allocation5 + $0x5a0] sm:$0xff]
    %v285 = vld [vmem:[#allocation5 + $0x5a8] sm:$0xff]
    %v286 = vld [vmem:[#allocation5 + $0x5b0] sm:$0xff]
    %v287 = vld [vmem:[#allocation5 + $0x5b8] sm:$0xff]
    %v288 = vld [vmem:[#allocation5 + $0x5c0] sm:$0xff]
    %v289 = vld [vmem:[#allocation5 + $0x5c8] sm:$0xff]
    %v290 = vld [vmem:[#allocation5 + $0x5d0] sm:$0xff]
    %v291 = vld [vmem:[#allocation5 + $0x5d8] sm:$0xff]
    %v292 = vld [vmem:[#allocation5 + $0x5e0] sm:$0xff]
    %v293 = vld [vmem:[#allocation5 + $0x5e8] sm:$0xff]
    %v294 = vld [vmem:[#allocation5 + $0x5f0] sm:$0xff]
    %v295 = vld [vmem:[#allocation5 + $0x5f8] sm:$0xff]
    %v296 = vld [vmem:[#allocation5 + $0x600] sm:$0xff]
    %v297 = vld [vmem:[#allocation5 + $0x608] sm:$0xff]
    %v298 = vld [vmem:[#allocation5 + $0x610] sm:$0xff]
    %v299 = vld [vmem:[#allocation5 + $0x618] sm:$0xff]
    %v300 = vld [vmem:[%s2] sm:$0xf]
    %v302 = vlaneseq
    %v303 = vshrl.u32 %v302, 7
    %v304 = vsub.s32 0, %v303
    %v305 = vrot.slane %v300, %v304
    %v306 = vlaneseq
    %v307 = vshrl.u32 %v306, 7
    %v308 = vsub.s32 1, %v307
    %v309 = vrot.slane %v300, %v308
    %v310 = vlaneseq
    %v311 = vshrl.u32 %v310, 7
    %v312 = vsub.s32 2, %v311
    %v313 = vrot.slane %v300, %v312
    %v314 = vlaneseq
    %v315 = vshrl.u32 %v314, 7
    %v316 = vsub.s32 3, %v315
    %v317 = vrot.slane %v300, %v316
    %v518 = vunpack.c.l.b16 %v104
    %v519 = vunpack.c.h.b16 %v104
    %v520 = vunpack.c.l.b16 %v105
    %v521 = vunpack.c.h.b16 %v105
    %v522 = vunpack.c.l.b16 %v106
    %v523 = vunpack.c.h.b16 %v106
    %v524 = vunpack.c.l.b16 %v107
    %v525 = vunpack.c.h.b16 %v107
    %v526 = vunpack.c.l.b16 %v108
    %v527 = vunpack.c.h.b16 %v108
    %v528 = vunpack.c.l.b16 %v109
    %v529 = vunpack.c.h.b16 %v109
    %v530 = vunpack.c.l.b16 %v110
    %v531 = vunpack.c.h.b16 %v110
    %v532 = vunpack.c.l.b16 %v111
    %v533 = vunpack.c.h.b16 %v111
    %v534 = vunpack.c.l.b16 %v112
    %v535 = vunpack.c.h.b16 %v112
    %v536 = vunpack.c.l.b16 %v113
    %v537 = vunpack.c.h.b16 %v113
    %v538 = vunpack.c.l.b16 %v114
    %v539 = vunpack.c.h.b16 %v114
    %v540 = vunpack.c.l.b16 %v115
    %v541 = vunpack.c.h.b16 %v115
    %v542 = vunpack.c.l.b16 %v116
    %v543 = vunpack.c.h.b16 %v116
    %v544 = vunpack.c.l.b16 %v117
    %v545 = vunpack.c.h.b16 %v117
    %v546 = vunpack.c.l.b16 %v118
    %v547 = vunpack.c.h.b16 %v118
    %v548 = vunpack.c.l.b16 %v119
    %v549 = vunpack.c.h.b16 %v119
    %v550 = vunpack.c.l.b16 %v120
    %v551 = vunpack.c.h.b16 %v120
    %v552 = vunpack.c.l.b16 %v121
    %v553 = vunpack.c.h.b16 %v121
    %v554 = vunpack.c.l.b16 %v122
    %v555 = vunpack.c.h.b16 %v122
    %v556 = vunpack.c.l.b16 %v123
    %v557 = vunpack.c.h.b16 %v123
    %v558 = vunpack.c.l.b16 %v124
    %v559 = vunpack.c.h.b16 %v124
    %v560 = vunpack.c.l.b16 %v125
    %v561 = vunpack.c.h.b16 %v125
    %v562 = vunpack.c.l.b16 %v126
    %v563 = vunpack.c.h.b16 %v126
    %v564 = vunpack.c.l.b16 %v127
    %v565 = vunpack.c.h.b16 %v127
    %v566 = vunpack.c.l.b16 %v128
    %v567 = vunpack.c.h.b16 %v128
    %v568 = vunpack.c.l.b16 %v129
    %v569 = vunpack.c.h.b16 %v129
    %v570 = vunpack.c.l.b16 %v130
    %v571 = vunpack.c.h.b16 %v130
    %v572 = vunpack.c.l.b16 %v131
    %v573 = vunpack.c.h.b16 %v131
    %v574 = vunpack.c.l.b16 %v132
    %v575 = vunpack.c.h.b16 %v132
    %v576 = vunpack.c.l.b16 %v133
    %v577 = vunpack.c.h.b16 %v133
    %v578 = vunpack.c.l.b16 %v134
    %v579 = vunpack.c.h.b16 %v134
    %v580 = vunpack.c.l.b16 %v135
    %v581 = vunpack.c.h.b16 %v135
    %v582 = vunpack.c.l.b16 %v136
    %v583 = vunpack.c.h.b16 %v136
    %v584 = vunpack.c.l.b16 %v137
    %v585 = vunpack.c.h.b16 %v137
    %v586 = vunpack.c.l.b16 %v138
    %v587 = vunpack.c.h.b16 %v138
    %v588 = vunpack.c.l.b16 %v139
    %v589 = vunpack.c.h.b16 %v139
    %v590 = vunpack.c.l.b16 %v140
    %v591 = vunpack.c.h.b16 %v140
    %v592 = vunpack.c.l.b16 %v141
    %v593 = vunpack.c.h.b16 %v141
    %v594 = vunpack.c.l.b16 %v142
    %v595 = vunpack.c.h.b16 %v142
    %v596 = vunpack.c.l.b16 %v143
    %v597 = vunpack.c.h.b16 %v143
    %v598 = vunpack.c.l.b16 %v144
    %v599 = vunpack.c.h.b16 %v144
    %v600 = vunpack.c.l.b16 %v145
    %v601 = vunpack.c.h.b16 %v145
    %v602 = vunpack.c.l.b16 %v146
    %v603 = vunpack.c.h.b16 %v146
    %v604 = vunpack.c.l.b16 %v147
    %v605 = vunpack.c.h.b16 %v147
    %v606 = vunpack.c.l.b16 %v148
    %v607 = vunpack.c.h.b16 %v148
    %v608 = vunpack.c.l.b16 %v149
    %v609 = vunpack.c.h.b16 %v149
    %v610 = vunpack.c.l.b16 %v150
    %v611 = vunpack.c.h.b16 %v150
    %v612 = vunpack.c.l.b16 %v151
    %v613 = vunpack.c.h.b16 %v151
    %v614 = vunpack.c.l.b16 %v152
    %v615 = vunpack.c.h.b16 %v152
    %v616 = vunpack.c.l.b16 %v153
    %v617 = vunpack.c.h.b16 %v153
    %v618 = vunpack.c.l.b16 %v154
    %v619 = vunpack.c.h.b16 %v154
    %v620 = vunpack.c.l.b16 %v155
    %v621 = vunpack.c.h.b16 %v155
    %v622 = vunpack.c.l.b16 %v156
    %v623 = vunpack.c.h.b16 %v156
    %v624 = vunpack.c.l.b16 %v157
    %v625 = vunpack.c.h.b16 %v157
    %v626 = vunpack.c.l.b16 %v158
    %v627 = vunpack.c.h.b16 %v158
    %v628 = vunpack.c.l.b16 %v159
    %v629 = vunpack.c.h.b16 %v159
    %v630 = vunpack.c.l.b16 %v160
    %v631 = vunpack.c.h.b16 %v160
    %v632 = vunpack.c.l.b16 %v161
    %v633 = vunpack.c.h.b16 %v161
    %v634 = vunpack.c.l.b16 %v162
    %v635 = vunpack.c.h.b16 %v162
    %v636 = vunpack.c.l.b16 %v163
    %v637 = vunpack.c.h.b16 %v163
    %v638 = vunpack.c.l.b16 %v164
    %v639 = vunpack.c.h.b16 %v164
    %v640 = vunpack.c.l.b16 %v165
    %v641 = vunpack.c.h.b16 %v165
    %v642 = vunpack.c.l.b16 %v166
    %v643 = vunpack.c.h.b16 %v166
    %v644 = vunpack.c.l.b16 %v167
    %v645 = vunpack.c.h.b16 %v167
    %v646 = vunpack.c.l.b16 %v168
    %v647 = vunpack.c.h.b16 %v168
    %v648 = vunpack.c.l.b16 %v169
    %v649 = vunpack.c.h.b16 %v169
    %v650 = vunpack.c.l.b16 %v170
    %v651 = vunpack.c.h.b16 %v170
    %v652 = vunpack.c.l.b16 %v171
    %v653 = vunpack.c.h.b16 %v171
    %v654 = vunpack.c.l.b16 %v172
    %v655 = vunpack.c.h.b16 %v172
    %v656 = vunpack.c.l.b16 %v173
    %v657 = vunpack.c.h.b16 %v173
    %v658 = vunpack.c.l.b16 %v174
    %v659 = vunpack.c.h.b16 %v174
    %v660 = vunpack.c.l.b16 %v175
    %v661 = vunpack.c.h.b16 %v175
    %v662 = vunpack.c.l.b16 %v176
    %v663 = vunpack.c.h.b16 %v176
    %v664 = vunpack.c.l.b16 %v177
    %v665 = vunpack.c.h.b16 %v177
    %v666 = vunpack.c.l.b16 %v178
    %v667 = vunpack.c.h.b16 %v178
    %v668 = vunpack.c.l.b16 %v179
    %v669 = vunpack.c.h.b16 %v179
    %v670 = vunpack.c.l.b16 %v180
    %v671 = vunpack.c.h.b16 %v180
    %v672 = vunpack.c.l.b16 %v181
    %v673 = vunpack.c.h.b16 %v181
    %v674 = vunpack.c.l.b16 %v182
    %v675 = vunpack.c.h.b16 %v182
    %v676 = vunpack.c.l.b16 %v183
    %v677 = vunpack.c.h.b16 %v183
    %v678 = vunpack.c.l.b16 %v184
    %v679 = vunpack.c.h.b16 %v184
    %v680 = vunpack.c.l.b16 %v185
    %v681 = vunpack.c.h.b16 %v185
    %v682 = vunpack.c.l.b16 %v186
    %v683 = vunpack.c.h.b16 %v186
    %v684 = vunpack.c.l.b16 %v187
    %v685 = vunpack.c.h.b16 %v187
    %v686 = vunpack.c.l.b16 %v188
    %v687 = vunpack.c.h.b16 %v188
    %v688 = vunpack.c.l.b16 %v189
    %v689 = vunpack.c.h.b16 %v189
    %v690 = vunpack.c.l.b16 %v190
    %v691 = vunpack.c.h.b16 %v190
    %v692 = vunpack.c.l.b16 %v191
    %v693 = vunpack.c.h.b16 %v191
    %v694 = vunpack.c.l.b16 %v192
    %v695 = vunpack.c.h.b16 %v192
    %v696 = vunpack.c.l.b16 %v193
    %v697 = vunpack.c.h.b16 %v193
    %v698 = vunpack.c.l.b16 %v194
    %v699 = vunpack.c.h.b16 %v194
    %v700 = vunpack.c.l.b16 %v195
    %v701 = vunpack.c.h.b16 %v195
    %v702 = vunpack.c.l.b16 %v196
    %v703 = vunpack.c.h.b16 %v196
    %v704 = vunpack.c.l.b16 %v197
    %v705 = vunpack.c.h.b16 %v197
    %v706 = vunpack.c.l.b16 %v198
    %v707 = vunpack.c.h.b16 %v198
    %v708 = vunpack.c.l.b16 %v199
    %v709 = vunpack.c.h.b16 %v199
    %v710 = vunpack.c.l.b16 %v200
    %v711 = vunpack.c.h.b16 %v200
    %v712 = vunpack.c.l.b16 %v201
    %v713 = vunpack.c.h.b16 %v201
    %v714 = vunpack.c.l.b16 %v202
    %v715 = vunpack.c.h.b16 %v202
    %v716 = vunpack.c.l.b16 %v203
    %v717 = vunpack.c.h.b16 %v203
    %v718 = vunpack.c.l.b16 %v204
    %v719 = vunpack.c.h.b16 %v204
    %v720 = vunpack.c.l.b16 %v205
    %v721 = vunpack.c.h.b16 %v205
    %v722 = vunpack.c.l.b16 %v206
    %v723 = vunpack.c.h.b16 %v206
    %v724 = vunpack.c.l.b16 %v207
    %v725 = vunpack.c.h.b16 %v207
    %v726 = vunpack.c.l.b16 %v208
    %v727 = vunpack.c.h.b16 %v208
    %v728 = vunpack.c.l.b16 %v209
    %v729 = vunpack.c.h.b16 %v209
    %v730 = vunpack.c.l.b16 %v210
    %v731 = vunpack.c.h.b16 %v210
    %v732 = vunpack.c.l.b16 %v211
    %v733 = vunpack.c.h.b16 %v211
    %v734 = vunpack.c.l.b16 %v212
    %v735 = vunpack.c.h.b16 %v212
    %v736 = vunpack.c.l.b16 %v213
    %v737 = vunpack.c.h.b16 %v213
    %v738 = vunpack.c.l.b16 %v214
    %v739 = vunpack.c.h.b16 %v214
    %v740 = vunpack.c.l.b16 %v215
    %v741 = vunpack.c.h.b16 %v215
    %v742 = vunpack.c.l.b16 %v216
    %v743 = vunpack.c.h.b16 %v216
    %v744 = vunpack.c.l.b16 %v217
    %v745 = vunpack.c.h.b16 %v217
    %v746 = vunpack.c.l.b16 %v218
    %v747 = vunpack.c.h.b16 %v218
    %v748 = vunpack.c.l.b16 %v219
    %v749 = vunpack.c.h.b16 %v219
    %v750 = vunpack.c.l.b16 %v220
    %v751 = vunpack.c.h.b16 %v220
    %v752 = vunpack.c.l.b16 %v221
    %v753 = vunpack.c.h.b16 %v221
    %v754 = vunpack.c.l.b16 %v222
    %v755 = vunpack.c.h.b16 %v222
    %v756 = vunpack.c.l.b16 %v223
    %v757 = vunpack.c.h.b16 %v223
    %v758 = vunpack.c.l.b16 %v224
    %v759 = vunpack.c.h.b16 %v224
    %v760 = vunpack.c.l.b16 %v225
    %v761 = vunpack.c.h.b16 %v225
    %v762 = vunpack.c.l.b16 %v226
    %v763 = vunpack.c.h.b16 %v226
    %v764 = vunpack.c.l.b16 %v227
    %v765 = vunpack.c.h.b16 %v227
    %v766 = vunpack.c.l.b16 %v228
    %v767 = vunpack.c.h.b16 %v228
    %v768 = vunpack.c.l.b16 %v229
    %v769 = vunpack.c.h.b16 %v229
    %v770 = vunpack.c.l.b16 %v230
    %v771 = vunpack.c.h.b16 %v230
    %v772 = vunpack.c.l.b16 %v231
    %v773 = vunpack.c.h.b16 %v231
    %v774 = vunpack.c.l.b16 %v232
    %v775 = vunpack.c.h.b16 %v232
    %v776 = vunpack.c.l.b16 %v233
    %v777 = vunpack.c.h.b16 %v233
    %v778 = vunpack.c.l.b16 %v234
    %v779 = vunpack.c.h.b16 %v234
    %v780 = vunpack.c.l.b16 %v235
    %v781 = vunpack.c.h.b16 %v235
    %v782 = vunpack.c.l.b16 %v236
    %v783 = vunpack.c.h.b16 %v236
    %v784 = vunpack.c.l.b16 %v237
    %v785 = vunpack.c.h.b16 %v237
    %v786 = vunpack.c.l.b16 %v238
    %v787 = vunpack.c.h.b16 %v238
    %v788 = vunpack.c.l.b16 %v239
    %v789 = vunpack.c.h.b16 %v239
    %v790 = vunpack.c.l.b16 %v240
    %v791 = vunpack.c.h.b16 %v240
    %v792 = vunpack.c.l.b16 %v241
    %v793 = vunpack.c.h.b16 %v241
    %v794 = vunpack.c.l.b16 %v242
    %v795 = vunpack.c.h.b16 %v242
    %v796 = vunpack.c.l.b16 %v243
    %v797 = vunpack.c.h.b16 %v243
    %v798 = vunpack.c.l.b16 %v244
    %v799 = vunpack.c.h.b16 %v244
    %v800 = vunpack.c.l.b16 %v245
    %v801 = vunpack.c.h.b16 %v245
    %v802 = vunpack.c.l.b16 %v246
    %v803 = vunpack.c.h.b16 %v246
    %v804 = vunpack.c.l.b16 %v247
    %v805 = vunpack.c.h.b16 %v247
    %v806 = vunpack.c.l.b16 %v248
    %v807 = vunpack.c.h.b16 %v248
    %v808 = vunpack.c.l.b16 %v249
    %v809 = vunpack.c.h.b16 %v249
    %v810 = vunpack.c.l.b16 %v250
    %v811 = vunpack.c.h.b16 %v250
    %v812 = vunpack.c.l.b16 %v251
    %v813 = vunpack.c.h.b16 %v251
    %v814 = vunpack.c.l.b16 %v252
    %v815 = vunpack.c.h.b16 %v252
    %v816 = vunpack.c.l.b16 %v253
    %v817 = vunpack.c.h.b16 %v253
    %v818 = vunpack.c.l.b16 %v254
    %v819 = vunpack.c.h.b16 %v254
    %v820 = vunpack.c.l.b16 %v255
    %v821 = vunpack.c.h.b16 %v255
    %v822 = vunpack.c.l.b16 %v256
    %v823 = vunpack.c.h.b16 %v256
    %v824 = vunpack.c.l.b16 %v257
    %v825 = vunpack.c.h.b16 %v257
    %v826 = vunpack.c.l.b16 %v258
    %v827 = vunpack.c.h.b16 %v258
    %v828 = vunpack.c.l.b16 %v259
    %v829 = vunpack.c.h.b16 %v259
    %v830 = vunpack.c.l.b16 %v260
    %v831 = vunpack.c.h.b16 %v260
    %v832 = vunpack.c.l.b16 %v261
    %v833 = vunpack.c.h.b16 %v261
    %v834 = vunpack.c.l.b16 %v262
    %v835 = vunpack.c.h.b16 %v262
    %v836 = vunpack.c.l.b16 %v263
    %v837 = vunpack.c.h.b16 %v263
    %v838 = vunpack.c.l.b16 %v264
    %v839 = vunpack.c.h.b16 %v264
    %v840 = vunpack.c.l.b16 %v265
    %v841 = vunpack.c.h.b16 %v265
    %v842 = vunpack.c.l.b16 %v266
    %v843 = vunpack.c.h.b16 %v266
    %v844 = vunpack.c.l.b16 %v267
    %v845 = vunpack.c.h.b16 %v267
    %v846 = vunpack.c.l.b16 %v268
    %v847 = vunpack.c.h.b16 %v268
    %v848 = vunpack.c.l.b16 %v269
    %v849 = vunpack.c.h.b16 %v269
    %v850 = vunpack.c.l.b16 %v270
    %v851 = vunpack.c.h.b16 %v270
    %v852 = vunpack.c.l.b16 %v271
    %v853 = vunpack.c.h.b16 %v271
    %v854 = vunpack.c.l.b16 %v272
    %v855 = vunpack.c.h.b16 %v272
    %v856 = vunpack.c.l.b16 %v273
    %v857 = vunpack.c.h.b16 %v273
    %v858 = vunpack.c.l.b16 %v274
    %v859 = vunpack.c.h.b16 %v274
    %v860 = vunpack.c.l.b16 %v275
    %v861 = vunpack.c.h.b16 %v275
    %v862 = vunpack.c.l.b16 %v276
    %v863 = vunpack.c.h.b16 %v276
    %v864 = vunpack.c.l.b16 %v277
    %v865 = vunpack.c.h.b16 %v277
    %v866 = vunpack.c.l.b16 %v278
    %v867 = vunpack.c.h.b16 %v278
    %v868 = vunpack.c.l.b16 %v279
    %v869 = vunpack.c.h.b16 %v279
    %v870 = vunpack.c.l.b16 %v280
    %v871 = vunpack.c.h.b16 %v280
    %v872 = vunpack.c.l.b16 %v281
    %v873 = vunpack.c.h.b16 %v281
    %v874 = vunpack.c.l.b16 %v282
    %v875 = vunpack.c.h.b16 %v282
    %v876 = vunpack.c.l.b16 %v283
    %v877 = vunpack.c.h.b16 %v283
    %v878 = vunpack.c.l.b16 %v284
    %v879 = vunpack.c.h.b16 %v284
    %v880 = vunpack.c.l.b16 %v285
    %v881 = vunpack.c.h.b16 %v285
    %v882 = vunpack.c.l.b16 %v286
    %v883 = vunpack.c.h.b16 %v286
    %v884 = vunpack.c.l.b16 %v287
    %v885 = vunpack.c.h.b16 %v287
    %v886 = vunpack.c.l.b16 %v288
    %v887 = vunpack.c.h.b16 %v288
    %v888 = vunpack.c.l.b16 %v289
    %v889 = vunpack.c.h.b16 %v289
    %v890 = vunpack.c.l.b16 %v290
    %v891 = vunpack.c.h.b16 %v290
    %v892 = vunpack.c.l.b16 %v291
    %v893 = vunpack.c.h.b16 %v291
    %v894 = vunpack.c.l.b16 %v292
    %v895 = vunpack.c.h.b16 %v292
    %v896 = vunpack.c.l.b16 %v293
    %v897 = vunpack.c.h.b16 %v293
    %v898 = vunpack.c.l.b16 %v294
    %v899 = vunpack.c.h.b16 %v294
    %v900 = vunpack.c.l.b16 %v295
    %v901 = vunpack.c.h.b16 %v295
    %v902 = vunpack.c.l.b16 %v296
    %v903 = vunpack.c.h.b16 %v296
    %v904 = vunpack.c.l.b16 %v297
    %v905 = vunpack.c.h.b16 %v297
    %v906 = vunpack.c.l.b16 %v298
    %v907 = vunpack.c.h.b16 %v298
    %v908 = vunpack.c.l.b16 %v299
    %v909 = vunpack.c.h.b16 %v299
    %v910 = vpack.c.b16 %v522, %v518
    %v911 = vpack.c.b16 %v523, %v519
    %v912 = vpack.c.b16 %v524, %v520
    %v913 = vpack.c.b16 %v525, %v521
    %v914 = vpack.c.b16 %v530, %v526
    %v915 = vpack.c.b16 %v531, %v527
    %v916 = vpack.c.b16 %v532, %v528
    %v917 = vpack.c.b16 %v533, %v529
    %v918 = vpack.c.b16 %v538, %v534
    %v919 = vpack.c.b16 %v539, %v535
    %v920 = vpack.c.b16 %v540, %v536
    %v921 = vpack.c.b16 %v541, %v537
    %v922 = vpack.c.b16 %v546, %v542
    %v923 = vpack.c.b16 %v547, %v543
    %v924 = vpack.c.b16 %v548, %v544
    %v925 = vpack.c.b16 %v549, %v545
    %v926 = vpack.c.b16 %v554, %v550
    %v927 = vpack.c.b16 %v555, %v551
    %v928 = vpack.c.b16 %v556, %v552
    %v929 = vpack.c.b16 %v557, %v553
    %v930 = vpack.c.b16 %v562, %v558
    %v931 = vpack.c.b16 %v563, %v559
    %v932 = vpack.c.b16 %v564, %v560
    %v933 = vpack.c.b16 %v565, %v561
    %v934 = vpack.c.b16 %v570, %v566
    %v935 = vpack.c.b16 %v571, %v567
    %v936 = vpack.c.b16 %v572, %v568
    %v937 = vpack.c.b16 %v573, %v569
    %v938 = vpack.c.b16 %v578, %v574
    %v939 = vpack.c.b16 %v579, %v575
    %v940 = vpack.c.b16 %v580, %v576
    %v941 = vpack.c.b16 %v581, %v577
    %v942 = vpack.c.b16 %v586, %v582
    %v943 = vpack.c.b16 %v587, %v583
    %v944 = vpack.c.b16 %v588, %v584
    %v945 = vpack.c.b16 %v589, %v585
    %v946 = vpack.c.b16 %v594, %v590
    %v947 = vpack.c.b16 %v595, %v591
    %v948 = vpack.c.b16 %v596, %v592
    %v949 = vpack.c.b16 %v597, %v593
    %v950 = vpack.c.b16 %v602, %v598
    %v951 = vpack.c.b16 %v603, %v599
    %v952 = vpack.c.b16 %v604, %v600
    %v953 = vpack.c.b16 %v605, %v601
    %v954 = vpack.c.b16 %v610, %v606
    %v955 = vpack.c.b16 %v611, %v607
    %v956 = vpack.c.b16 %v612, %v608
    %v957 = vpack.c.b16 %v613, %v609
    %v958 = vpack.c.b16 %v618, %v614
    %v959 = vpack.c.b16 %v619, %v615
    %v960 = vpack.c.b16 %v620, %v616
    %v961 = vpack.c.b16 %v621, %v617
    %v962 = vpack.c.b16 %v626, %v622
    %v963 = vpack.c.b16 %v627, %v623
    %v964 = vpack.c.b16 %v628, %v624
    %v965 = vpack.c.b16 %v629, %v625
    %v966 = vpack.c.b16 %v634, %v630
    %v967 = vpack.c.b16 %v635, %v631
    %v968 = vpack.c.b16 %v636, %v632
    %v969 = vpack.c.b16 %v637, %v633
    %v970 = vpack.c.b16 %v642, %v638
    %v971 = vpack.c.b16 %v643, %v639
    %v972 = vpack.c.b16 %v644, %v640
    %v973 = vpack.c.b16 %v645, %v641
    %v974 = vpack.c.b16 %v650, %v646
    %v975 = vpack.c.b16 %v651, %v647
    %v976 = vpack.c.b16 %v652, %v648
    %v977 = vpack.c.b16 %v653, %v649
    %v978 = vpack.c.b16 %v658, %v654
    %v979 = vpack.c.b16 %v659, %v655
    %v980 = vpack.c.b16 %v660, %v656
    %v981 = vpack.c.b16 %v661, %v657
    %v982 = vpack.c.b16 %v666, %v662
    %v983 = vpack.c.b16 %v667, %v663
    %v984 = vpack.c.b16 %v668, %v664
    %v985 = vpack.c.b16 %v669, %v665
    %v986 = vpack.c.b16 %v674, %v670
    %v987 = vpack.c.b16 %v675, %v671
    %v988 = vpack.c.b16 %v676, %v672
    %v989 = vpack.c.b16 %v677, %v673
    %v990 = vpack.c.b16 %v682, %v678
    %v991 = vpack.c.b16 %v683, %v679
    %v992 = vpack.c.b16 %v684, %v680
    %v993 = vpack.c.b16 %v685, %v681
    %v994 = vpack.c.b16 %v690, %v686
    %v995 = vpack.c.b16 %v691, %v687
    %v996 = vpack.c.b16 %v692, %v688
    %v997 = vpack.c.b16 %v693, %v689
    %v998 = vpack.c.b16 %v698, %v694
    %v999 = vpack.c.b16 %v699, %v695
    %v1000 = vpack.c.b16 %v700, %v696
    %v1001 = vpack.c.b16 %v701, %v697
    %v1002 = vpack.c.b16 %v706, %v702
    %v1003 = vpack.c.b16 %v707, %v703
    %v1004 = vpack.c.b16 %v708, %v704
    %v1005 = vpack.c.b16 %v709, %v705
    %v1006 = vpack.c.b16 %v714, %v710
    %v1007 = vpack.c.b16 %v715, %v711
    %v1008 = vpack.c.b16 %v716, %v712
    %v1009 = vpack.c.b16 %v717, %v713
    %v1010 = vpack.c.b16 %v722, %v718
    %v1011 = vpack.c.b16 %v723, %v719
    %v1012 = vpack.c.b16 %v724, %v720
    %v1013 = vpack.c.b16 %v725, %v721
    %v1014 = vpack.c.b16 %v730, %v726
    %v1015 = vpack.c.b16 %v731, %v727
    %v1016 = vpack.c.b16 %v732, %v728
    %v1017 = vpack.c.b16 %v733, %v729
    %v1018 = vpack.c.b16 %v738, %v734
    %v1019 = vpack.c.b16 %v739, %v735
    %v1020 = vpack.c.b16 %v740, %v736
    %v1021 = vpack.c.b16 %v741, %v737
    %v1022 = vpack.c.b16 %v746, %v742
    %v1023 = vpack.c.b16 %v747, %v743
    %v1024 = vpack.c.b16 %v748, %v744
    %v1025 = vpack.c.b16 %v749, %v745
    %v1026 = vpack.c.b16 %v754, %v750
    %v1027 = vpack.c.b16 %v755, %v751
    %v1028 = vpack.c.b16 %v756, %v752
    %v1029 = vpack.c.b16 %v757, %v753
    %v1030 = vpack.c.b16 %v762, %v758
    %v1031 = vpack.c.b16 %v763, %v759
    %v1032 = vpack.c.b16 %v764, %v760
    %v1033 = vpack.c.b16 %v765, %v761
    %v1034 = vpack.c.b16 %v770, %v766
    %v1035 = vpack.c.b16 %v771, %v767
    %v1036 = vpack.c.b16 %v772, %v768
    %v1037 = vpack.c.b16 %v773, %v769
    %v1038 = vpack.c.b16 %v778, %v774
    %v1039 = vpack.c.b16 %v779, %v775
    %v1040 = vpack.c.b16 %v780, %v776
    %v1041 = vpack.c.b16 %v781, %v777
    %v1042 = vpack.c.b16 %v786, %v782
    %v1043 = vpack.c.b16 %v787, %v783
    %v1044 = vpack.c.b16 %v788, %v784
    %v1045 = vpack.c.b16 %v789, %v785
    %v1046 = vpack.c.b16 %v794, %v790
    %v1047 = vpack.c.b16 %v795, %v791
    %v1048 = vpack.c.b16 %v796, %v792
    %v1049 = vpack.c.b16 %v797, %v793
    %v1050 = vpack.c.b16 %v802, %v798
    %v1051 = vpack.c.b16 %v803, %v799
    %v1052 = vpack.c.b16 %v804, %v800
    %v1053 = vpack.c.b16 %v805, %v801
    %v1054 = vpack.c.b16 %v810, %v806
    %v1055 = vpack.c.b16 %v811, %v807
    %v1056 = vpack.c.b16 %v812, %v808
    %v1057 = vpack.c.b16 %v813, %v809
    %v1058 = vpack.c.b16 %v818, %v814
    %v1059 = vpack.c.b16 %v819, %v815
    %v1060 = vpack.c.b16 %v820, %v816
    %v1061 = vpack.c.b16 %v821, %v817
    %v1062 = vpack.c.b16 %v826, %v822
    %v1063 = vpack.c.b16 %v827, %v823
    %v1064 = vpack.c.b16 %v828, %v824
    %v1065 = vpack.c.b16 %v829, %v825
    %v1066 = vpack.c.b16 %v834, %v830
    %v1067 = vpack.c.b16 %v835, %v831
    %v1068 = vpack.c.b16 %v836, %v832
    %v1069 = vpack.c.b16 %v837, %v833
    %v1070 = vpack.c.b16 %v842, %v838
    %v1071 = vpack.c.b16 %v843, %v839
    %v1072 = vpack.c.b16 %v844, %v840
    %v1073 = vpack.c.b16 %v845, %v841
    %v1074 = vpack.c.b16 %v850, %v846
    %v1075 = vpack.c.b16 %v851, %v847
    %v1076 = vpack.c.b16 %v852, %v848
    %v1077 = vpack.c.b16 %v853, %v849
    %v1078 = vpack.c.b16 %v858, %v854
    %v1079 = vpack.c.b16 %v859, %v855
    %v1080 = vpack.c.b16 %v860, %v856
    %v1081 = vpack.c.b16 %v861, %v857
    %v1082 = vpack.c.b16 %v866, %v862
    %v1083 = vpack.c.b16 %v867, %v863
    %v1084 = vpack.c.b16 %v868, %v864
    %v1085 = vpack.c.b16 %v869, %v865
    %v1086 = vpack.c.b16 %v874, %v870
    %v1087 = vpack.c.b16 %v875, %v871
    %v1088 = vpack.c.b16 %v876, %v872
    %v1089 = vpack.c.b16 %v877, %v873
    %v1090 = vpack.c.b16 %v882, %v878
    %v1091 = vpack.c.b16 %v883, %v879
    %v1092 = vpack.c.b16 %v884, %v880
    %v1093 = vpack.c.b16 %v885, %v881
    %v1094 = vpack.c.b16 %v890, %v886
    %v1095 = vpack.c.b16 %v891, %v887
    %v1096 = vpack.c.b16 %v892, %v888
    %v1097 = vpack.c.b16 %v893, %v889
    %v1098 = vpack.c.b16 %v898, %v894
    %v1099 = vpack.c.b16 %v899, %v895
    %v1100 = vpack.c.b16 %v900, %v896
    %v1101 = vpack.c.b16 %v901, %v897
    %v1102 = vpack.c.b16 %v906, %v902
    %v1103 = vpack.c.b16 %v907, %v903
    %v1104 = vpack.c.b16 %v908, %v904
    %v1105 = vpack.c.b16 %v909, %v905
    %vm1302 = vcmask 130048
    %v1304 = vsel %vm1302, %v103, 0
    %1306 = vmatprep.subr.bf16.mxu0 %v911
    %1307 = vmatpush1.bf16.msra.mxu0 %v910
    %1308 = vmatprep.subr.bf16.mxu0 %v915
    %1309 = vmatpush1.bf16.msra.mxu0 %v914
    %1310 = vmatprep.subr.bf16.mxu0 %v919
    %1311 = vmatpush1.bf16.msra.mxu0 %v918
    %1312 = vmatprep.subr.bf16.mxu0 %v923
    %1313 = vmatpush1.bf16.msra.mxu0 %v922
    %1314 = vmatprep.subr.bf16.mxu0 %v927
    %1315 = vmatpush1.bf16.msra.mxu0 %v926
    %1316 = vmatprep.subr.bf16.mxu0 %v931
    %1317 = vmatpush1.bf16.msra.mxu0 %v930
    %1318 = vmatprep.subr.bf16.mxu0 %v935
    %1319 = vmatpush1.bf16.msra.mxu0 %v934
    %1320 = vmatprep.subr.bf16.mxu0 %v939
    %1321 = vmatpush1.bf16.msra.mxu0 %v938
    %1322 = vmatprep.subr.bf16.mxu0 %v943
    %1323 = vmatpush1.bf16.msra.mxu0 %v942
    %1324 = vmatprep.subr.bf16.mxu0 %v947
    %1325 = vmatpush1.bf16.msra.mxu0 %v946
    %1326 = vmatprep.subr.bf16.mxu0 %v951
    %1327 = vmatpush1.bf16.msra.mxu0 %v950
    %1328 = vmatprep.subr.bf16.mxu0 %v955
    %1329 = vmatpush1.bf16.msra.mxu0 %v954
    %1330 = vmatprep.subr.bf16.mxu0 %v959
    %1331 = vmatpush1.bf16.msra.mxu0 %v958
    %1332 = vmatprep.subr.bf16.mxu0 %v963
    %1333 = vmatpush1.bf16.msra.mxu0 %v962
    %1334 = vmatprep.subr.bf16.mxu0 %v967
    %1335 = vmatpush1.bf16.msra.mxu0 %v966
    %1336 = vmatprep.subr.bf16.mxu0 %v971
    %1337 = vmatpush1.bf16.msra.mxu0 %v970
    %1338 = vmatprep.mubr.bf16.mxu0 %v98
    %1339 = vmatmul.mubr.bf16.gmra.mrb[0].mxu0 %v97
    %v1340 = vpop.f32.mrb[0].mxu0
    %v1341 = vadd.f32 %v305, %v1340
    %v1342 = vpop.f32.mrb[0].mxu0
    %v1343 = vadd.f32 %v309, %v1342
    %v1344 = vpop.f32.mrb[0].mxu0
    %v1345 = vadd.f32 %v305, %v1344
    %v1346 = vpop.f32.mrb[0].mxu0
    %v1347 = vadd.f32 %v309, %v1346
    %1348 = vdwg.mxu0
    %1349 = vmatprep.subr.bf16.mxu0 %v975
    %1350 = vmatpush1.bf16.msra.mxu0 %v974
    %1351 = vmatprep.subr.bf16.mxu0 %v979
    %1352 = vmatpush1.bf16.msra.mxu0 %v978
    %1353 = vmatprep.subr.bf16.mxu0 %v983
    %1354 = vmatpush1.bf16.msra.mxu0 %v982
    %1355 = vmatprep.subr.bf16.mxu0 %v987
    %1356 = vmatpush1.bf16.msra.mxu0 %v986
    %1357 = vmatprep.subr.bf16.mxu0 %v991
    %1358 = vmatpush1.bf16.msra.mxu0 %v990
    %1359 = vmatprep.subr.bf16.mxu0 %v995
    %1360 = vmatpush1.bf16.msra.mxu0 %v994
    %1361 = vmatprep.subr.bf16.mxu0 %v999
    %1362 = vmatpush1.bf16.msra.mxu0 %v998
    %1363 = vmatprep.subr.bf16.mxu0 %v1003
    %1364 = vmatpush1.bf16.msra.mxu0 %v1002
    %1365 = vmatprep.subr.bf16.mxu0 %v1007
    %1366 = vmatpush1.bf16.msra.mxu0 %v1006
    %1367 = vmatprep.subr.bf16.mxu0 %v1011
    %1368 = vmatpush1.bf16.msra.mxu0 %v1010
    %1369 = vmatprep.subr.bf16.mxu0 %v1015
    %1370 = vmatpush1.bf16.msra.mxu0 %v1014
    %1371 = vmatprep.subr.bf16.mxu0 %v1019
    %1372 = vmatpush1.bf16.msra.mxu0 %v1018
    %1373 = vmatprep.subr.bf16.mxu0 %v1023
    %1374 = vmatpush1.bf16.msra.mxu0 %v1022
    %1375 = vmatprep.subr.bf16.mxu0 %v1027
    %1376 = vmatpush1.bf16.msra.mxu0 %v1026
    %1377 = vmatprep.subr.bf16.mxu0 %v1031
    %1378 = vmatpush1.bf16.msra.mxu0 %v1030
    %1379 = vmatprep.subr.bf16.mxu0 %v1035
    %1380 = vmatpush1.bf16.msra.mxu0 %v1034
    %1381 = vmatprep.mubr.bf16.mxu0 %v100
    %1382 = vmatmul.mubr.bf16.gmra.mrb[0].mxu0 %v99
    %v1383 = vpop.f32.mrb[0].mxu0
    %v1384 = vadd.f32 %v1341, %v1383
    %v1385 = vpop.f32.mrb[0].mxu0
    %v1386 = vadd.f32 %v1343, %v1385
    %v1387 = vpop.f32.mrb[0].mxu0
    %v1388 = vadd.f32 %v1345, %v1387
    %v1389 = vpop.f32.mrb[0].mxu0
    %v1390 = vadd.f32 %v1347, %v1389
    %1391 = vdwg.mxu0
    %1392 = vmatprep.subr.bf16.mxu0 %v1039
    %1393 = vmatpush1.bf16.msra.mxu0 %v1038
    %1394 = vmatprep.subr.bf16.mxu0 %v1043
    %1395 = vmatpush1.bf16.msra.mxu0 %v1042
    %1396 = vmatprep.subr.bf16.mxu0 %v1047
    %1397 = vmatpush1.bf16.msra.mxu0 %v1046
    %1398 = vmatprep.subr.bf16.mxu0 %v1051
    %1399 = vmatpush1.bf16.msra.mxu0 %v1050
    %1400 = vmatprep.subr.bf16.mxu0 %v1055
    %1401 = vmatpush1.bf16.msra.mxu0 %v1054
    %1402 = vmatprep.subr.bf16.mxu0 %v1059
    %1403 = vmatpush1.bf16.msra.mxu0 %v1058
    %1404 = vmatprep.subr.bf16.mxu0 %v1063
    %1405 = vmatpush1.bf16.msra.mxu0 %v1062
    %1406 = vmatprep.subr.bf16.mxu0 %v1067
    %1407 = vmatpush1.bf16.msra.mxu0 %v1066
    %1408 = vmatprep.subr.bf16.mxu0 %v1071
    %1409 = vmatpush1.bf16.msra.mxu0 %v1070
    %1410 = vmatprep.subr.bf16.mxu0 %v1075
    %1411 = vmatpush1.bf16.msra.mxu0 %v1074
    %1412 = vmatprep.subr.bf16.mxu0 %v1079
    %1413 = vmatpush1.bf16.msra.mxu0 %v1078
    %1414 = vmatprep.subr.bf16.mxu0 %v1083
    %1415 = vmatpush1.bf16.msra.mxu0 %v1082
    %1416 = vmatprep.subr.bf16.mxu0 %v1087
    %1417 = vmatpush1.bf16.msra.mxu0 %v1086
    %1418 = vmatprep.subr.bf16.mxu0 %v1091
    %1419 = vmatpush1.bf16.msra.mxu0 %v1090
    %1420 = vmatprep.subr.bf16.mxu0 %v1095
    %1421 = vmatpush1.bf16.msra.mxu0 %v1094
    %1422 = vmatprep.subr.bf16.mxu0 %v1099
    %1423 = vmatpush1.bf16.msra.mxu0 %v1098
    %1424 = vmatprep.mubr.bf16.mxu0 %v102
    %1425 = vmatmul.mubr.bf16.gmra.mrb[0].mxu0 %v101
    %v1426 = vpop.f32.mrb[0].mxu0
    %v1427 = vadd.f32 %v1384, %v1426
    %v1428 = vpop.f32.mrb[0].mxu0
    %v1429 = vadd.f32 %v1386, %v1428
    %v1430 = vpop.f32.mrb[0].mxu0
    %v1431 = vadd.f32 %v1388, %v1430
    %v1432 = vpop.f32.mrb[0].mxu0
    %v1433 = vadd.f32 %v1390, %v1432
    %1434 = vdwg.mxu0
    %1435 = vmatprep.subr.bf16.mxu0 %v1103
    %1436 = vmatpush1.bf16.msra.mxu0 %v1102
    %1437 = vmatprep.subr.bf16.mxu0 0
    %1438 = vmatpush1.bf16.msra.mxu0 0
    %1439 = vmatprep.subr.bf16.mxu0 0
    %1440 = vmatpush1.bf16.msra.mxu0 0
    %1441 = vmatprep.subr.bf16.mxu0 0
    %1442 = vmatpush1.bf16.msra.mxu0 0
    %1443 = vmatprep.subr.bf16.mxu0 0
    %1444 = vmatpush1.bf16.msra.mxu0 0
    %1445 = vmatprep.subr.bf16.mxu0 0
    %1446 = vmatpush1.bf16.msra.mxu0 0
    %1447 = vmatprep.subr.bf16.mxu0 0
    %1448 = vmatpush1.bf16.msra.mxu0 0
    %1449 = vmatprep.subr.bf16.mxu0 0
    %1450 = vmatpush1.bf16.msra.mxu0 0
    %1451 = vmatprep.subr.bf16.mxu0 0
    %1452 = vmatpush1.bf16.msra.mxu0 0
    %1453 = vmatprep.subr.bf16.mxu0 0
    %1454 = vmatpush1.bf16.msra.mxu0 0
    %1455 = vmatprep.subr.bf16.mxu0 0
    %1456 = vmatpush1.bf16.msra.mxu0 0
    %1457 = vmatprep.subr.bf16.mxu0 0
    %1458 = vmatpush1.bf16.msra.mxu0 0
    %1459 = vmatprep.subr.bf16.mxu0 0
    %1460 = vmatpush1.bf16.msra.mxu0 0
    %1461 = vmatprep.subr.bf16.mxu0 0
    %1462 = vmatpush1.bf16.msra.mxu0 0
    %1463 = vmatprep.subr.bf16.mxu0 0
    %1464 = vmatpush1.bf16.msra.mxu0 0
    %1465 = vmatprep.subr.bf16.mxu0 0
    %1466 = vmatpush1.bf16.msra.mxu0 0
    %1467 = vmatprep.mubr.bf16.mxu0 0
    %1468 = vmatmul.mubr.bf16.gmra.mrb[0].mxu0 %v1304
    %v1469 = vpop.f32.mrb[0].mxu0
    %v1470 = vadd.f32 %v1427, %v1469
    %v1471 = vpop.f32.mrb[0].mxu0
    %v1472 = vadd.f32 %v1429, %v1471
    %v1473 = vpop.f32.mrb[0].mxu0
    %v1474 = vadd.f32 %v1431, %v1473
    %v1475 = vpop.f32.mrb[0].mxu0
    %v1476 = vadd.f32 %v1433, %v1475
    %1477 = vdwg.mxu0
    %1478 = vmatprep.subr.bf16.mxu0 %v913
    %1479 = vmatpush1.bf16.msra.mxu0 %v912
    %1480 = vmatprep.subr.bf16.mxu0 %v917
    %1481 = vmatpush1.bf16.msra.mxu0 %v916
    %1482 = vmatprep.subr.bf16.mxu0 %v921
    %1483 = vmatpush1.bf16.msra.mxu0 %v920
    %1484 = vmatprep.subr.bf16.mxu0 %v925
    %1485 = vmatpush1.bf16.msra.mxu0 %v924
    %1486 = vmatprep.subr.bf16.mxu0 %v929
    %1487 = vmatpush1.bf16.msra.mxu0 %v928
    %1488 = vmatprep.subr.bf16.mxu0 %v933
    %1489 = vmatpush1.bf16.msra.mxu0 %v932
    %1490 = vmatprep.subr.bf16.mxu0 %v937
    %1491 = vmatpush1.bf16.msra.mxu0 %v936
    %1492 = vmatprep.subr.bf16.mxu0 %v941
    %1493 = vmatpush1.bf16.msra.mxu0 %v940
    %1494 = vmatprep.subr.bf16.mxu0 %v945
    %1495 = vmatpush1.bf16.msra.mxu0 %v944
    %1496 = vmatprep.subr.bf16.mxu0 %v949
    %1497 = vmatpush1.bf16.msra.mxu0 %v948
    %1498 = vmatprep.subr.bf16.mxu0 %v953
    %1499 = vmatpush1.bf16.msra.mxu0 %v952
    %1500 = vmatprep.subr.bf16.mxu0 %v957
    %1501 = vmatpush1.bf16.msra.mxu0 %v956
    %1502 = vmatprep.subr.bf16.mxu0 %v961
    %1503 = vmatpush1.bf16.msra.mxu0 %v960
    %1504 = vmatprep.subr.bf16.mxu0 %v965
    %1505 = vmatpush1.bf16.msra.mxu0 %v964
    %1506 = vmatprep.subr.bf16.mxu0 %v969
    %1507 = vmatpush1.bf16.msra.mxu0 %v968
    %1508 = vmatprep.subr.bf16.mxu0 %v973
    %1509 = vmatpush1.bf16.msra.mxu0 %v972
    %1510 = vmatprep.mubr.bf16.mxu0 %v98
    %1511 = vmatmul.mubr.bf16.gmra.mrb[0].mxu0 %v97
    %v1512 = vpop.f32.mrb[0].mxu0
    %v1513 = vadd.f32 %v313, %v1512
    %v1514 = vpop.f32.mrb[0].mxu0
    %v1515 = vadd.f32 %v317, %v1514
    %v1516 = vpop.f32.mrb[0].mxu0
    %v1517 = vadd.f32 %v313, %v1516
    %v1518 = vpop.f32.mrb[0].mxu0
    %v1519 = vadd.f32 %v317, %v1518
    %1520 = vdwg.mxu0
    %1521 = vmatprep.subr.bf16.mxu0 %v977
    %1522 = vmatpush1.bf16.msra.mxu0 %v976
    %1523 = vmatprep.subr.bf16.mxu0 %v981
    %1524 = vmatpush1.bf16.msra.mxu0 %v980
    %1525 = vmatprep.subr.bf16.mxu0 %v985
    %1526 = vmatpush1.bf16.msra.mxu0 %v984
    %1527 = vmatprep.subr.bf16.mxu0 %v989
    %1528 = vmatpush1.bf16.msra.mxu0 %v988
    %1529 = vmatprep.subr.bf16.mxu0 %v993
    %1530 = vmatpush1.bf16.msra.mxu0 %v992
    %1531 = vmatprep.subr.bf16.mxu0 %v997
    %1532 = vmatpush1.bf16.msra.mxu0 %v996
    %1533 = vmatprep.subr.bf16.mxu0 %v1001
    %1534 = vmatpush1.bf16.msra.mxu0 %v1000
    %1535 = vmatprep.subr.bf16.mxu0 %v1005
    %1536 = vmatpush1.bf16.msra.mxu0 %v1004
    %1537 = vmatprep.subr.bf16.mxu0 %v1009
    %1538 = vmatpush1.bf16.msra.mxu0 %v1008
    %1539 = vmatprep.subr.bf16.mxu0 %v1013
    %1540 = vmatpush1.bf16.msra.mxu0 %v1012
    %1541 = vmatprep.subr.bf16.mxu0 %v1017
    %1542 = vmatpush1.bf16.msra.mxu0 %v1016
    %1543 = vmatprep.subr.bf16.mxu0 %v1021
    %1544 = vmatpush1.bf16.msra.mxu0 %v1020
    %1545 = vmatprep.subr.bf16.mxu0 %v1025
    %1546 = vmatpush1.bf16.msra.mxu0 %v1024
    %1547 = vmatprep.subr.bf16.mxu0 %v1029
    %1548 = vmatpush1.bf16.msra.mxu0 %v1028
    %1549 = vmatprep.subr.bf16.mxu0 %v1033
    %1550 = vmatpush1.bf16.msra.mxu0 %v1032
    %1551 = vmatprep.subr.bf16.mxu0 %v1037
    %1552 = vmatpush1.bf16.msra.mxu0 %v1036
    %1553 = vmatprep.mubr.bf16.mxu0 %v100
    %1554 = vmatmul.mubr.bf16.gmra.mrb[0].mxu0 %v99
    %v1555 = vpop.f32.mrb[0].mxu0
    %v1556 = vadd.f32 %v1513, %v1555
    %v1557 = vpop.f32.mrb[0].mxu0
    %v1558 = vadd.f32 %v1515, %v1557
    %v1559 = vpop.f32.mrb[0].mxu0
    %v1560 = vadd.f32 %v1517, %v1559
    %v1561 = vpop.f32.mrb[0].mxu0
    %v1562 = vadd.f32 %v1519, %v1561
    %1563 = vdwg.mxu0
    %1564 = vmatprep.subr.bf16.mxu0 %v1041
    %1565 = vmatpush1.bf16.msra.mxu0 %v1040
    %1566 = vmatprep.subr.bf16.mxu0 %v1045
    %1567 = vmatpush1.bf16.msra.mxu0 %v1044
    %1568 = vmatprep.subr.bf16.mxu0 %v1049
    %1569 = vmatpush1.bf16.msra.mxu0 %v1048
    %1570 = vmatprep.subr.bf16.mxu0 %v1053
    %1571 = vmatpush1.bf16.msra.mxu0 %v1052
    %1572 = vmatprep.subr.bf16.mxu0 %v1057
    %1573 = vmatpush1.bf16.msra.mxu0 %v1056
    %1574 = vmatprep.subr.bf16.mxu0 %v1061
    %1575 = vmatpush1.bf16.msra.mxu0 %v1060
    %1576 = vmatprep.subr.bf16.mxu0 %v1065
    %1577 = vmatpush1.bf16.msra.mxu0 %v1064
    %1578 = vmatprep.subr.bf16.mxu0 %v1069
    %1579 = vmatpush1.bf16.msra.mxu0 %v1068
    %1580 = vmatprep.subr.bf16.mxu0 %v1073
    %1581 = vmatpush1.bf16.msra.mxu0 %v1072
    %1582 = vmatprep.subr.bf16.mxu0 %v1077
    %1583 = vmatpush1.bf16.msra.mxu0 %v1076
    %1584 = vmatprep.subr.bf16.mxu0 %v1081
    %1585 = vmatpush1.bf16.msra.mxu0 %v1080
    %1586 = vmatprep.subr.bf16.mxu0 %v1085
    %1587 = vmatpush1.bf16.msra.mxu0 %v1084
    %1588 = vmatprep.subr.bf16.mxu0 %v1089
    %1589 = vmatpush1.bf16.msra.mxu0 %v1088
    %1590 = vmatprep.subr.bf16.mxu0 %v1093
    %1591 = vmatpush1.bf16.msra.mxu0 %v1092
    %1592 = vmatprep.subr.bf16.mxu0 %v1097
    %1593 = vmatpush1.bf16.msra.mxu0 %v1096
    %1594 = vmatprep.subr.bf16.mxu0 %v1101
    %1595 = vmatpush1.bf16.msra.mxu0 %v1100
    %1596 = vmatprep.mubr.bf16.mxu0 %v102
    %1597 = vmatmul.mubr.bf16.gmra.mrb[0].mxu0 %v101
    %v1598 = vpop.f32.mrb[0].mxu0
    %v1599 = vadd.f32 %v1556, %v1598
    %v1600 = vpop.f32.mrb[0].mxu0
    %v1601 = vadd.f32 %v1558, %v1600
    %v1602 = vpop.f32.mrb[0].mxu0
    %v1603 = vadd.f32 %v1560, %v1602
    %v1604 = vpop.f32.mrb[0].mxu0
    %v1605 = vadd.f32 %v1562, %v1604
    %1606 = vdwg.mxu0
    %1607 = vmatprep.subr.bf16.mxu0 %v1105
    %1608 = vmatpush1.bf16.msra.mxu0 %v1104
    %1609 = vmatprep.subr.bf16.mxu0 0
    %1610 = vmatpush1.bf16.msra.mxu0 0
    %1611 = vmatprep.subr.bf16.mxu0 0
    %1612 = vmatpush1.bf16.msra.mxu0 0
    %1613 = vmatprep.subr.bf16.mxu0 0
    %1614 = vmatpush1.bf16.msra.mxu0 0
    %1615 = vmatprep.subr.bf16.mxu0 0
    %1616 = vmatpush1.bf16.msra.mxu0 0
    %1617 = vmatprep.subr.bf16.mxu0 0
    %1618 = vmatpush1.bf16.msra.mxu0 0
    %1619 = vmatprep.subr.bf16.mxu0 0
    %1620 = vmatpush1.bf16.msra.mxu0 0
    %1621 = vmatprep.subr.bf16.mxu0 0
    %1622 = vmatpush1.bf16.msra.mxu0 0
    %1623 = vmatprep.subr.bf16.mxu0 0
    %1624 = vmatpush1.bf16.msra.mxu0 0
    %1625 = vmatprep.subr.bf16.mxu0 0
    %1626 = vmatpush1.bf16.msra.mxu0 0
    %1627 = vmatprep.subr.bf16.mxu0 0
    %1628 = vmatpush1.bf16.msra.mxu0 0
    %1629 = vmatprep.subr.bf16.mxu0 0
    %1630 = vmatpush1.bf16.msra.mxu0 0
    %1631 = vmatprep.subr.bf16.mxu0 0
    %1632 = vmatpush1.bf16.msra.mxu0 0
    %1633 = vmatprep.subr.bf16.mxu0 0
    %1634 = vmatpush1.bf16.msra.mxu0 0
    %1635 = vmatprep.subr.bf16.mxu0 0
    %1636 = vmatpush1.bf16.msra.mxu0 0
    %1637 = vmatprep.subr.bf16.mxu0 0
    %1638 = vmatpush1.bf16.msra.mxu0 0
    %1639 = vmatprep.mubr.bf16.mxu0 0
    %1640 = vmatmul.mubr.bf16.gmra.mrb[0].mxu0 %v1304
    %v1641 = vpop.f32.mrb[0].mxu0
    %v1642 = vadd.f32 %v1599, %v1641
    %v1643 = vpop.f32.mrb[0].mxu0
    %v1644 = vadd.f32 %v1601, %v1643
    %v1645 = vpop.f32.mrb[0].mxu0
    %v1646 = vadd.f32 %v1603, %v1645
    %v1647 = vpop.f32.mrb[0].mxu0
    %v1648 = vadd.f32 %v1605, %v1647
    %1649 = vdwg.mxu0
    %v1650 = vmax.f32 %v1470, 0.0
    %v1651 = vmax.f32 %v1472, 0.0
    %v1652 = vmax.f32 %v1642, 0.0
    %v1653 = vmax.f32 %v1644, 0.0
    %v1654 = vmax.f32 %v1474, 0.0
    %v1655 = vmax.f32 %v1476, 0.0
    %v1656 = vmax.f32 %v1646, 0.0
    %v1657 = vmax.f32 %v1648, 0.0
    %v1658 = vpack.c.bf16 %v1654, %v1650
    %v1659 = vpack.c.bf16 %v1655, %v1651
    %v1660 = vpack.c.bf16 %v1656, %v1652
    %v1661 = vpack.c.bf16 %v1657, %v1653
    %v1662 = vld [vmem:[#allocation7] sm:$0xff]
    %v1663 = vld [vmem:[#allocation7 + $0x8] sm:$0xff]
    %v1664 = vld [vmem:[#allocation7 + $0x10] sm:$0xff]
    %v1665 = vld [vmem:[#allocation7 + $0x18] sm:$0xff]
    %v1666 = vld [vmem:[#allocation7 + $0x20] sm:$0xff]
    %v1667 = vld [vmem:[#allocation7 + $0x28] sm:$0xff]
    %v1668 = vld [vmem:[#allocation7 + $0x30] sm:$0xff]
    %v1669 = vld [vmem:[#allocation7 + $0x38] sm:$0xff]
    %v1670 = vld [vmem:[#allocation7 + $0x40] sm:$0xff]
    %v1671 = vld [vmem:[#allocation7 + $0x48] sm:$0xff]
    %v1672 = vld [vmem:[#allocation7 + $0x50] sm:$0xff]
    %v1673 = vld [vmem:[#allocation7 + $0x58] sm:$0xff]
    %v1674 = vld [vmem:[#allocation7 + $0x60] sm:$0xff]
    %v1675 = vld [vmem:[#allocation7 + $0x68] sm:$0xff]
    %v1676 = vld [vmem:[#allocation7 + $0x70] sm:$0xff]
    %v1677 = vld [vmem:[#allocation7 + $0x78] sm:$0xff]
    %v1678 = vld [vmem:[#allocation7 + $0x80] sm:$0xff]
    %v1679 = vld [vmem:[#allocation7 + $0x88] sm:$0xff]
    %v1680 = vld [vmem:[#allocation7 + $0x90] sm:$0xff]
    %v1681 = vld [vmem:[#allocation7 + $0x98] sm:$0xff]
    %v1682 = vld [vmem:[#allocation7 + $0xa0] sm:$0xff]
    %v1683 = vld [vmem:[#allocation7 + $0xa8] sm:$0xff]
    %v1684 = vld [vmem:[#allocation7 + $0xb0] sm:$0xff]
    %v1685 = vld [vmem:[#allocation7 + $0xb8] sm:$0xff]
    %v1686 = vld [vmem:[#allocation7 + $0xc0] sm:$0xff]
    %v1687 = vld [vmem:[#allocation7 + $0xc8] sm:$0xff]
    %v1688 = vld [vmem:[#allocation7 + $0xd0] sm:$0xff]
    %v1689 = vld [vmem:[#allocation7 + $0xd8] sm:$0xff]
    %v1690 = vld [vmem:[#allocation7 + $0xe0] sm:$0xff]
    %v1691 = vld [vmem:[#allocation7 + $0xe8] sm:$0xff]
    %v1692 = vld [vmem:[#allocation7 + $0xf0] sm:$0xff]
    %v1693 = vld [vmem:[#allocation7 + $0xf8] sm:$0xff]
    %v1694 = vld [vmem:[#allocation7 + $0x100] sm:$0xff]
    %v1695 = vld [vmem:[#allocation7 + $0x108] sm:$0xff]
    %v1696 = vld [vmem:[#allocation7 + $0x110] sm:$0xff]
    %v1697 = vld [vmem:[#allocation7 + $0x118] sm:$0xff]
    %v1698 = vld [vmem:[#allocation7 + $0x120] sm:$0xff]
    %v1699 = vld [vmem:[#allocation7 + $0x128] sm:$0xff]
    %v1700 = vld [vmem:[#allocation7 + $0x130] sm:$0xff]
    %v1701 = vld [vmem:[#allocation7 + $0x138] sm:$0xff]
    %v1702 = vld [vmem:[#allocation7 + $0x140] sm:$0xff]
    %v1703 = vld [vmem:[#allocation7 + $0x148] sm:$0xff]
    %v1704 = vld [vmem:[#allocation7 + $0x150] sm:$0xff]
    %v1705 = vld [vmem:[#allocation7 + $0x158] sm:$0xff]
    %v1706 = vld [vmem:[#allocation7 + $0x160] sm:$0xff]
    %v1707 = vld [vmem:[#allocation7 + $0x168] sm:$0xff]
    %v1708 = vld [vmem:[#allocation7 + $0x170] sm:$0xff]
    %v1709 = vld [vmem:[#allocation7 + $0x178] sm:$0xff]
    %v1710 = vld [vmem:[#allocation7 + $0x180] sm:$0xff]
    %v1711 = vld [vmem:[#allocation7 + $0x188] sm:$0xff]
    %v1712 = vld [vmem:[#allocation7 + $0x190] sm:$0xff]
    %v1713 = vld [vmem:[#allocation7 + $0x198] sm:$0xff]
    %v1714 = vld [vmem:[#allocation7 + $0x1a0] sm:$0xff]
    %v1715 = vld [vmem:[#allocation7 + $0x1a8] sm:$0xff]
    %v1716 = vld [vmem:[#allocation7 + $0x1b0] sm:$0xff]
    %v1717 = vld [vmem:[#allocation7 + $0x1b8] sm:$0xff]
    %v1718 = vld [vmem:[#allocation7 + $0x1c0] sm:$0xff]
    %v1719 = vld [vmem:[#allocation7 + $0x1c8] sm:$0xff]
    %v1720 = vld [vmem:[#allocation7 + $0x1d0] sm:$0xff]
    %v1721 = vld [vmem:[#allocation7 + $0x1d8] sm:$0xff]
    %v1722 = vld [vmem:[#allocation7 + $0x1e0] sm:$0xff]
    %v1723 = vld [vmem:[#allocation7 + $0x1e8] sm:$0xff]
    %v1724 = vld [vmem:[#allocation7 + $0x1f0] sm:$0xff]
    %v1725 = vld [vmem:[#allocation7 + $0x1f8] sm:$0xff]
    %v1726 = vld [vmem:[#allocation7 + $0x200] sm:$0xff]
    %v1727 = vld [vmem:[#allocation7 + $0x208] sm:$0xff]
    %v1728 = vld [vmem:[#allocation7 + $0x210] sm:$0xff]
    %v1729 = vld [vmem:[#allocation7 + $0x218] sm:$0xff]
    %v1730 = vld [vmem:[#allocation7 + $0x220] sm:$0xff]
    %v1731 = vld [vmem:[#allocation7 + $0x228] sm:$0xff]
    %v1732 = vld [vmem:[#allocation7 + $0x230] sm:$0xff]
    %v1733 = vld [vmem:[#allocation7 + $0x238] sm:$0xff]
    %v1734 = vld [vmem:[#allocation7 + $0x240] sm:$0xff]
    %v1735 = vld [vmem:[#allocation7 + $0x248] sm:$0xff]
    %v1736 = vld [vmem:[#allocation7 + $0x250] sm:$0xff]
    %v1737 = vld [vmem:[#allocation7 + $0x258] sm:$0xff]
    %v1738 = vld [vmem:[#allocation7 + $0x260] sm:$0xff]
    %v1739 = vld [vmem:[#allocation7 + $0x268] sm:$0xff]
    %v1740 = vld [vmem:[#allocation7 + $0x270] sm:$0xff]
    %v1741 = vld [vmem:[#allocation7 + $0x278] sm:$0xff]
    %v1742 = vld [vmem:[#allocation7 + $0x280] sm:$0xff]
    %v1743 = vld [vmem:[#allocation7 + $0x288] sm:$0xff]
    %v1744 = vld [vmem:[#allocation7 + $0x290] sm:$0xff]
    %v1745 = vld [vmem:[#allocation7 + $0x298] sm:$0xff]
    %v1746 = vld [vmem:[#allocation7 + $0x2a0] sm:$0xff]
    %v1747 = vld [vmem:[#allocation7 + $0x2a8] sm:$0xff]
    %v1748 = vld [vmem:[#allocation7 + $0x2b0] sm:$0xff]
    %v1749 = vld [vmem:[#allocation7 + $0x2b8] sm:$0xff]
    %v1750 = vld [vmem:[#allocation7 + $0x2c0] sm:$0xff]
    %v1751 = vld [vmem:[#allocation7 + $0x2c8] sm:$0xff]
    %v1752 = vld [vmem:[#allocation7 + $0x2d0] sm:$0xff]
    %v1753 = vld [vmem:[#allocation7 + $0x2d8] sm:$0xff]
    %v1754 = vld [vmem:[#allocation7 + $0x2e0] sm:$0xff]
    %v1755 = vld [vmem:[#allocation7 + $0x2e8] sm:$0xff]
    %v1756 = vld [vmem:[#allocation7 + $0x2f0] sm:$0xff]
    %v1757 = vld [vmem:[#allocation7 + $0x2f8] sm:$0xff]
    %v1758 = vld [vmem:[#allocation7 + $0x300] sm:$0xff]
    %v1759 = vld [vmem:[#allocation7 + $0x308] sm:$0xff]
    %v1760 = vld [vmem:[#allocation7 + $0x310] sm:$0xff]
    %v1761 = vld [vmem:[#allocation7 + $0x318] sm:$0xff]
    %v1762 = vld [vmem:[#allocation7 + $0x320] sm:$0xff]
    %v1763 = vld [vmem:[#allocation7 + $0x328] sm:$0xff]
    %v1764 = vld [vmem:[#allocation7 + $0x330] sm:$0xff]
    %v1765 = vld [vmem:[#allocation7 + $0x338] sm:$0xff]
    %v1766 = vld [vmem:[#allocation7 + $0x340] sm:$0xff]
    %v1767 = vld [vmem:[#allocation7 + $0x348] sm:$0xff]
    %v1768 = vld [vmem:[#allocation7 + $0x350] sm:$0xff]
    %v1769 = vld [vmem:[#allocation7 + $0x358] sm:$0xff]
    %v1770 = vld [vmem:[#allocation7 + $0x360] sm:$0xff]
    %v1771 = vld [vmem:[#allocation7 + $0x368] sm:$0xff]
    %v1772 = vld [vmem:[#allocation7 + $0x370] sm:$0xff]
    %v1773 = vld [vmem:[#allocation7 + $0x378] sm:$0xff]
    %v1774 = vld [vmem:[#allocation7 + $0x380] sm:$0xff]
    %v1775 = vld [vmem:[#allocation7 + $0x388] sm:$0xff]
    %v1776 = vld [vmem:[#allocation7 + $0x390] sm:$0xff]
    %v1777 = vld [vmem:[#allocation7 + $0x398] sm:$0xff]
    %v1778 = vld [vmem:[#allocation7 + $0x3a0] sm:$0xff]
    %v1779 = vld [vmem:[#allocation7 + $0x3a8] sm:$0xff]
    %v1780 = vld [vmem:[#allocation7 + $0x3b0] sm:$0xff]
    %v1781 = vld [vmem:[#allocation7 + $0x3b8] sm:$0xff]
    %v1782 = vld [vmem:[#allocation7 + $0x3c0] sm:$0xff]
    %v1783 = vld [vmem:[#allocation7 + $0x3c8] sm:$0xff]
    %v1784 = vld [vmem:[#allocation7 + $0x3d0] sm:$0xff]
    %v1785 = vld [vmem:[#allocation7 + $0x3d8] sm:$0xff]
    %v1786 = vld [vmem:[#allocation7 + $0x3e0] sm:$0xff]
    %v1787 = vld [vmem:[#allocation7 + $0x3e8] sm:$0xff]
    %v1788 = vld [vmem:[#allocation7 + $0x3f0] sm:$0xff]
    %v1789 = vld [vmem:[#allocation7 + $0x3f8] sm:$0xff]
    %v1790 = vld [vmem:[%s4] sm:$0xf]
    %v1792 = vlaneseq
    %v1793 = vshrl.u32 %v1792, 7
    %v1794 = vsub.s32 0, %v1793
    %v1795 = vrot.slane %v1790, %v1794
    %v1796 = vlaneseq
    %v1797 = vshrl.u32 %v1796, 7
    %v1798 = vsub.s32 1, %v1797
    %v1799 = vrot.slane %v1790, %v1798
    %v1800 = vlaneseq
    %v1801 = vshrl.u32 %v1800, 7
    %v1802 = vsub.s32 2, %v1801
    %v1803 = vrot.slane %v1790, %v1802
    %v1804 = vlaneseq
    %v1805 = vshrl.u32 %v1804, 7
    %v1806 = vsub.s32 3, %v1805
    %v1807 = vrot.slane %v1790, %v1806
    %v1940 = vunpack.c.l.b16 %v1662
    %v1941 = vunpack.c.h.b16 %v1662
    %v1942 = vunpack.c.l.b16 %v1663
    %v1943 = vunpack.c.h.b16 %v1663
    %v1944 = vunpack.c.l.b16 %v1664
    %v1945 = vunpack.c.h.b16 %v1664
    %v1946 = vunpack.c.l.b16 %v1665
    %v1947 = vunpack.c.h.b16 %v1665
    %v1948 = vunpack.c.l.b16 %v1666
    %v1949 = vunpack.c.h.b16 %v1666
    %v1950 = vunpack.c.l.b16 %v1667
    %v1951 = vunpack.c.h.b16 %v1667
    %v1952 = vunpack.c.l.b16 %v1668
    %v1953 = vunpack.c.h.b16 %v1668
    %v1954 = vunpack.c.l.b16 %v1669
    %v1955 = vunpack.c.h.b16 %v1669
    %v1956 = vunpack.c.l.b16 %v1670
    %v1957 = vunpack.c.h.b16 %v1670
    %v1958 = vunpack.c.l.b16 %v1671
    %v1959 = vunpack.c.h.b16 %v1671
    %v1960 = vunpack.c.l.b16 %v1672
    %v1961 = vunpack.c.h.b16 %v1672
    %v1962 = vunpack.c.l.b16 %v1673
    %v1963 = vunpack.c.h.b16 %v1673
    %v1964 = vunpack.c.l.b16 %v1674
    %v1965 = vunpack.c.h.b16 %v1674
    %v1966 = vunpack.c.l.b16 %v1675
    %v1967 = vunpack.c.h.b16 %v1675
    %v1968 = vunpack.c.l.b16 %v1676
    %v1969 = vunpack.c.h.b16 %v1676
    %v1970 = vunpack.c.l.b16 %v1677
    %v1971 = vunpack.c.h.b16 %v1677
    %v1972 = vunpack.c.l.b16 %v1678
    %v1973 = vunpack.c.h.b16 %v1678
    %v1974 = vunpack.c.l.b16 %v1679
    %v1975 = vunpack.c.h.b16 %v1679
    %v1976 = vunpack.c.l.b16 %v1680
    %v1977 = vunpack.c.h.b16 %v1680
    %v1978 = vunpack.c.l.b16 %v1681
    %v1979 = vunpack.c.h.b16 %v1681
    %v1980 = vunpack.c.l.b16 %v1682
    %v1981 = vunpack.c.h.b16 %v1682
    %v1982 = vunpack.c.l.b16 %v1683
    %v1983 = vunpack.c.h.b16 %v1683
    %v1984 = vunpack.c.l.b16 %v1684
    %v1985 = vunpack.c.h.b16 %v1684
    %v1986 = vunpack.c.l.b16 %v1685
    %v1987 = vunpack.c.h.b16 %v1685
    %v1988 = vunpack.c.l.b16 %v1686
    %v1989 = vunpack.c.h.b16 %v1686
    %v1990 = vunpack.c.l.b16 %v1687
    %v1991 = vunpack.c.h.b16 %v1687
    %v1992 = vunpack.c.l.b16 %v1688
    %v1993 = vunpack.c.h.b16 %v1688
    %v1994 = vunpack.c.l.b16 %v1689
    %v1995 = vunpack.c.h.b16 %v1689
    %v1996 = vunpack.c.l.b16 %v1690
    %v1997 = vunpack.c.h.b16 %v1690
    %v1998 = vunpack.c.l.b16 %v1691
    %v1999 = vunpack.c.h.b16 %v1691
    %v2000 = vunpack.c.l.b16 %v1692
    %v2001 = vunpack.c.h.b16 %v1692
    %v2002 = vunpack.c.l.b16 %v1693
    %v2003 = vunpack.c.h.b16 %v1693
    %v2004 = vunpack.c.l.b16 %v1694
    %v2005 = vunpack.c.h.b16 %v1694
    %v2006 = vunpack.c.l.b16 %v1695
    %v2007 = vunpack.c.h.b16 %v1695
    %v2008 = vunpack.c.l.b16 %v1696
    %v2009 = vunpack.c.h.b16 %v1696
    %v2010 = vunpack.c.l.b16 %v1697
    %v2011 = vunpack.c.h.b16 %v1697
    %v2012 = vunpack.c.l.b16 %v1698
    %v2013 = vunpack.c.h.b16 %v1698
    %v2014 = vunpack.c.l.b16 %v1699
    %v2015 = vunpack.c.h.b16 %v1699
    %v2016 = vunpack.c.l.b16 %v1700
    %v2017 = vunpack.c.h.b16 %v1700
    %v2018 = vunpack.c.l.b16 %v1701
    %v2019 = vunpack.c.h.b16 %v1701
    %v2020 = vunpack.c.l.b16 %v1702
    %v2021 = vunpack.c.h.b16 %v1702
    %v2022 = vunpack.c.l.b16 %v1703
    %v2023 = vunpack.c.h.b16 %v1703
    %v2024 = vunpack.c.l.b16 %v1704
    %v2025 = vunpack.c.h.b16 %v1704
    %v2026 = vunpack.c.l.b16 %v1705
    %v2027 = vunpack.c.h.b16 %v1705
    %v2028 = vunpack.c.l.b16 %v1706
    %v2029 = vunpack.c.h.b16 %v1706
    %v2030 = vunpack.c.l.b16 %v1707
    %v2031 = vunpack.c.h.b16 %v1707
    %v2032 = vunpack.c.l.b16 %v1708
    %v2033 = vunpack.c.h.b16 %v1708
    %v2034 = vunpack.c.l.b16 %v1709
    %v2035 = vunpack.c.h.b16 %v1709
    %v2036 = vunpack.c.l.b16 %v1710
    %v2037 = vunpack.c.h.b16 %v1710
    %v2038 = vunpack.c.l.b16 %v1711
    %v2039 = vunpack.c.h.b16 %v1711
    %v2040 = vunpack.c.l.b16 %v1712
    %v2041 = vunpack.c.h.b16 %v1712
    %v2042 = vunpack.c.l.b16 %v1713
    %v2043 = vunpack.c.h.b16 %v1713
    %v2044 = vunpack.c.l.b16 %v1714
    %v2045 = vunpack.c.h.b16 %v1714
    %v2046 = vunpack.c.l.b16 %v1715
    %v2047 = vunpack.c.h.b16 %v1715
    %v2048 = vunpack.c.l.b16 %v1716
    %v2049 = vunpack.c.h.b16 %v1716
    %v2050 = vunpack.c.l.b16 %v1717
    %v2051 = vunpack.c.h.b16 %v1717
    %v2052 = vunpack.c.l.b16 %v1718
    %v2053 = vunpack.c.h.b16 %v1718
    %v2054 = vunpack.c.l.b16 %v1719
    %v2055 = vunpack.c.h.b16 %v1719
    %v2056 = vunpack.c.l.b16 %v1720
    %v2057 = vunpack.c.h.b16 %v1720
    %v2058 = vunpack.c.l.b16 %v1721
    %v2059 = vunpack.c.h.b16 %v1721
    %v2060 = vunpack.c.l.b16 %v1722
    %v2061 = vunpack.c.h.b16 %v1722
    %v2062 = vunpack.c.l.b16 %v1723
    %v2063 = vunpack.c.h.b16 %v1723
    %v2064 = vunpack.c.l.b16 %v1724
    %v2065 = vunpack.c.h.b16 %v1724
    %v2066 = vunpack.c.l.b16 %v1725
    %v2067 = vunpack.c.h.b16 %v1725
    %v2068 = vunpack.c.l.b16 %v1726
    %v2069 = vunpack.c.h.b16 %v1726
    %v2070 = vunpack.c.l.b16 %v1727
    %v2071 = vunpack.c.h.b16 %v1727
    %v2072 = vunpack.c.l.b16 %v1728
    %v2073 = vunpack.c.h.b16 %v1728
    %v2074 = vunpack.c.l.b16 %v1729
    %v2075 = vunpack.c.h.b16 %v1729
    %v2076 = vunpack.c.l.b16 %v1730
    %v2077 = vunpack.c.h.b16 %v1730
    %v2078 = vunpack.c.l.b16 %v1731
    %v2079 = vunpack.c.h.b16 %v1731
    %v2080 = vunpack.c.l.b16 %v1732
    %v2081 = vunpack.c.h.b16 %v1732
    %v2082 = vunpack.c.l.b16 %v1733
    %v2083 = vunpack.c.h.b16 %v1733
    %v2084 = vunpack.c.l.b16 %v1734
    %v2085 = vunpack.c.h.b16 %v1734
    %v2086 = vunpack.c.l.b16 %v1735
    %v2087 = vunpack.c.h.b16 %v1735
    %v2088 = vunpack.c.l.b16 %v1736
    %v2089 = vunpack.c.h.b16 %v1736
    %v2090 = vunpack.c.l.b16 %v1737
    %v2091 = vunpack.c.h.b16 %v1737
    %v2092 = vunpack.c.l.b16 %v1738
    %v2093 = vunpack.c.h.b16 %v1738
    %v2094 = vunpack.c.l.b16 %v1739
    %v2095 = vunpack.c.h.b16 %v1739
    %v2096 = vunpack.c.l.b16 %v1740
    %v2097 = vunpack.c.h.b16 %v1740
    %v2098 = vunpack.c.l.b16 %v1741
    %v2099 = vunpack.c.h.b16 %v1741
    %v2100 = vunpack.c.l.b16 %v1742
    %v2101 = vunpack.c.h.b16 %v1742
    %v2102 = vunpack.c.l.b16 %v1743
    %v2103 = vunpack.c.h.b16 %v1743
    %v2104 = vunpack.c.l.b16 %v1744
    %v2105 = vunpack.c.h.b16 %v1744
    %v2106 = vunpack.c.l.b16 %v1745
    %v2107 = vunpack.c.h.b16 %v1745
    %v2108 = vunpack.c.l.b16 %v1746
    %v2109 = vunpack.c.h.b16 %v1746
    %v2110 = vunpack.c.l.b16 %v1747
    %v2111 = vunpack.c.h.b16 %v1747
    %v2112 = vunpack.c.l.b16 %v1748
    %v2113 = vunpack.c.h.b16 %v1748
    %v2114 = vunpack.c.l.b16 %v1749
    %v2115 = vunpack.c.h.b16 %v1749
    %v2116 = vunpack.c.l.b16 %v1750
    %v2117 = vunpack.c.h.b16 %v1750
    %v2118 = vunpack.c.l.b16 %v1751
    %v2119 = vunpack.c.h.b16 %v1751
    %v2120 = vunpack.c.l.b16 %v1752
    %v2121 = vunpack.c.h.b16 %v1752
    %v2122 = vunpack.c.l.b16 %v1753
    %v2123 = vunpack.c.h.b16 %v1753
    %v2124 = vunpack.c.l.b16 %v1754
    %v2125 = vunpack.c.h.b16 %v1754
    %v2126 = vunpack.c.l.b16 %v1755
    %v2127 = vunpack.c.h.b16 %v1755
    %v2128 = vunpack.c.l.b16 %v1756
    %v2129 = vunpack.c.h.b16 %v1756
    %v2130 = vunpack.c.l.b16 %v1757
    %v2131 = vunpack.c.h.b16 %v1757
    %v2132 = vunpack.c.l.b16 %v1758
    %v2133 = vunpack.c.h.b16 %v1758
    %v2134 = vunpack.c.l.b16 %v1759
    %v2135 = vunpack.c.h.b16 %v1759
    %v2136 = vunpack.c.l.b16 %v1760
    %v2137 = vunpack.c.h.b16 %v1760
    %v2138 = vunpack.c.l.b16 %v1761
    %v2139 = vunpack.c.h.b16 %v1761
    %v2140 = vunpack.c.l.b16 %v1762
    %v2141 = vunpack.c.h.b16 %v1762
    %v2142 = vunpack.c.l.b16 %v1763
    %v2143 = vunpack.c.h.b16 %v1763
    %v2144 = vunpack.c.l.b16 %v1764
    %v2145 = vunpack.c.h.b16 %v1764
    %v2146 = vunpack.c.l.b16 %v1765
    %v2147 = vunpack.c.h.b16 %v1765
    %v2148 = vunpack.c.l.b16 %v1766
    %v2149 = vunpack.c.h.b16 %v1766
    %v2150 = vunpack.c.l.b16 %v1767
    %v2151 = vunpack.c.h.b16 %v1767
    %v2152 = vunpack.c.l.b16 %v1768
    %v2153 = vunpack.c.h.b16 %v1768
    %v2154 = vunpack.c.l.b16 %v1769
    %v2155 = vunpack.c.h.b16 %v1769
    %v2156 = vunpack.c.l.b16 %v1770
    %v2157 = vunpack.c.h.b16 %v1770
    %v2158 = vunpack.c.l.b16 %v1771
    %v2159 = vunpack.c.h.b16 %v1771
    %v2160 = vunpack.c.l.b16 %v1772
    %v2161 = vunpack.c.h.b16 %v1772
    %v2162 = vunpack.c.l.b16 %v1773
    %v2163 = vunpack.c.h.b16 %v1773
    %v2164 = vunpack.c.l.b16 %v1774
    %v2165 = vunpack.c.h.b16 %v1774
    %v2166 = vunpack.c.l.b16 %v1775
    %v2167 = vunpack.c.h.b16 %v1775
    %v2168 = vunpack.c.l.b16 %v1776
    %v2169 = vunpack.c.h.b16 %v1776
    %v2170 = vunpack.c.l.b16 %v1777
    %v2171 = vunpack.c.h.b16 %v1777
    %v2172 = vunpack.c.l.b16 %v1778
    %v2173 = vunpack.c.h.b16 %v1778
    %v2174 = vunpack.c.l.b16 %v1779
    %v2175 = vunpack.c.h.b16 %v1779
    %v2176 = vunpack.c.l.b16 %v1780
    %v2177 = vunpack.c.h.b16 %v1780
    %v2178 = vunpack.c.l.b16 %v1781
    %v2179 = vunpack.c.h.b16 %v1781
    %v2180 = vunpack.c.l.b16 %v1782
    %v2181 = vunpack.c.h.b16 %v1782
    %v2182 = vunpack.c.l.b16 %v1783
    %v2183 = vunpack.c.h.b16 %v1783
    %v2184 = vunpack.c.l.b16 %v1784
    %v2185 = vunpack.c.h.b16 %v1784
    %v2186 = vunpack.c.l.b16 %v1785
    %v2187 = vunpack.c.h.b16 %v1785
    %v2188 = vunpack.c.l.b16 %v1786
    %v2189 = vunpack.c.h.b16 %v1786
    %v2190 = vunpack.c.l.b16 %v1787
    %v2191 = vunpack.c.h.b16 %v1787
    %v2192 = vunpack.c.l.b16 %v1788
    %v2193 = vunpack.c.h.b16 %v1788
    %v2194 = vunpack.c.l.b16 %v1789
    %v2195 = vunpack.c.h.b16 %v1789
    %v2196 = vpack.c.b16 %v1944, %v1940
    %v2197 = vpack.c.b16 %v1945, %v1941
    %v2198 = vpack.c.b16 %v1946, %v1942
    %v2199 = vpack.c.b16 %v1947, %v1943
    %v2200 = vpack.c.b16 %v1952, %v1948
    %v2201 = vpack.c.b16 %v1953, %v1949
    %v2202 = vpack.c.b16 %v1954, %v1950
    %v2203 = vpack.c.b16 %v1955, %v1951
    %v2204 = vpack.c.b16 %v1960, %v1956
    %v2205 = vpack.c.b16 %v1961, %v1957
    %v2206 = vpack.c.b16 %v1962, %v1958
    %v2207 = vpack.c.b16 %v1963, %v1959
    %v2208 = vpack.c.b16 %v1968, %v1964
    %v2209 = vpack.c.b16 %v1969, %v1965
    %v2210 = vpack.c.b16 %v1970, %v1966
    %v2211 = vpack.c.b16 %v1971, %v1967
    %v2212 = vpack.c.b16 %v1976, %v1972
    %v2213 = vpack.c.b16 %v1977, %v1973
    %v2214 = vpack.c.b16 %v1978, %v1974
    %v2215 = vpack.c.b16 %v1979, %v1975
    %v2216 = vpack.c.b16 %v1984, %v1980
    %v2217 = vpack.c.b16 %v1985, %v1981
    %v2218 = vpack.c.b16 %v1986, %v1982
    %v2219 = vpack.c.b16 %v1987, %v1983
    %v2220 = vpack.c.b16 %v1992, %v1988
    %v2221 = vpack.c.b16 %v1993, %v1989
    %v2222 = vpack.c.b16 %v1994, %v1990
    %v2223 = vpack.c.b16 %v1995, %v1991
    %v2224 = vpack.c.b16 %v2000, %v1996
    %v2225 = vpack.c.b16 %v2001, %v1997
    %v2226 = vpack.c.b16 %v2002, %v1998
    %v2227 = vpack.c.b16 %v2003, %v1999
    %v2228 = vpack.c.b16 %v2008, %v2004
    %v2229 = vpack.c.b16 %v2009, %v2005
    %v2230 = vpack.c.b16 %v2010, %v2006
    %v2231 = vpack.c.b16 %v2011, %v2007
    %v2232 = vpack.c.b16 %v2016, %v2012
    %v2233 = vpack.c.b16 %v2017, %v2013
    %v2234 = vpack.c.b16 %v2018, %v2014
    %v2235 = vpack.c.b16 %v2019, %v2015
    %v2236 = vpack.c.b16 %v2024, %v2020
    %v2237 = vpack.c.b16 %v2025, %v2021
    %v2238 = vpack.c.b16 %v2026, %v2022
    %v2239 = vpack.c.b16 %v2027, %v2023
    %v2240 = vpack.c.b16 %v2032, %v2028
    %v2241 = vpack.c.b16 %v2033, %v2029
    %v2242 = vpack.c.b16 %v2034, %v2030
    %v2243 = vpack.c.b16 %v2035, %v2031
    %v2244 = vpack.c.b16 %v2040, %v2036
    %v2245 = vpack.c.b16 %v2041, %v2037
    %v2246 = vpack.c.b16 %v2042, %v2038
    %v2247 = vpack.c.b16 %v2043, %v2039
    %v2248 = vpack.c.b16 %v2048, %v2044
    %v2249 = vpack.c.b16 %v2049, %v2045
    %v2250 = vpack.c.b16 %v2050, %v2046
    %v2251 = vpack.c.b16 %v2051, %v2047
    %v2252 = vpack.c.b16 %v2056, %v2052
    %v2253 = vpack.c.b16 %v2057, %v2053
    %v2254 = vpack.c.b16 %v2058, %v2054
    %v2255 = vpack.c.b16 %v2059, %v2055
    %v2256 = vpack.c.b16 %v2064, %v2060
    %v2257 = vpack.c.b16 %v2065, %v2061
    %v2258 = vpack.c.b16 %v2066, %v2062
    %v2259 = vpack.c.b16 %v2067, %v2063
    %v2260 = vpack.c.b16 %v2072, %v2068
    %v2261 = vpack.c.b16 %v2073, %v2069
    %v2262 = vpack.c.b16 %v2074, %v2070
    %v2263 = vpack.c.b16 %v2075, %v2071
    %v2264 = vpack.c.b16 %v2080, %v2076
    %v2265 = vpack.c.b16 %v2081, %v2077
    %v2266 = vpack.c.b16 %v2082, %v2078
    %v2267 = vpack.c.b16 %v2083, %v2079
    %v2268 = vpack.c.b16 %v2088, %v2084
    %v2269 = vpack.c.b16 %v2089, %v2085
    %v2270 = vpack.c.b16 %v2090, %v2086
    %v2271 = vpack.c.b16 %v2091, %v2087
    %v2272 = vpack.c.b16 %v2096, %v2092
    %v2273 = vpack.c.b16 %v2097, %v2093
    %v2274 = vpack.c.b16 %v2098, %v2094
    %v2275 = vpack.c.b16 %v2099, %v2095
    %v2276 = vpack.c.b16 %v2104, %v2100
    %v2277 = vpack.c.b16 %v2105, %v2101
    %v2278 = vpack.c.b16 %v2106, %v2102
    %v2279 = vpack.c.b16 %v2107, %v2103
    %v2280 = vpack.c.b16 %v2112, %v2108
    %v2281 = vpack.c.b16 %v2113, %v2109
    %v2282 = vpack.c.b16 %v2114, %v2110
    %v2283 = vpack.c.b16 %v2115, %v2111
    %v2284 = vpack.c.b16 %v2120, %v2116
    %v2285 = vpack.c.b16 %v2121, %v2117
    %v2286 = vpack.c.b16 %v2122, %v2118
    %v2287 = vpack.c.b16 %v2123, %v2119
    %v2288 = vpack.c.b16 %v2128, %v2124
    %v2289 = vpack.c.b16 %v2129, %v2125
    %v2290 = vpack.c.b16 %v2130, %v2126
    %v2291 = vpack.c.b16 %v2131, %v2127
    %v2292 = vpack.c.b16 %v2136, %v2132
    %v2293 = vpack.c.b16 %v2137, %v2133
    %v2294 = vpack.c.b16 %v2138, %v2134
    %v2295 = vpack.c.b16 %v2139, %v2135
    %v2296 = vpack.c.b16 %v2144, %v2140
    %v2297 = vpack.c.b16 %v2145, %v2141
    %v2298 = vpack.c.b16 %v2146, %v2142
    %v2299 = vpack.c.b16 %v2147, %v2143
    %v2300 = vpack.c.b16 %v2152, %v2148
    %v2301 = vpack.c.b16 %v2153, %v2149
    %v2302 = vpack.c.b16 %v2154, %v2150
    %v2303 = vpack.c.b16 %v2155, %v2151
    %v2304 = vpack.c.b16 %v2160, %v2156
    %v2305 = vpack.c.b16 %v2161, %v2157
    %v2306 = vpack.c.b16 %v2162, %v2158
    %v2307 = vpack.c.b16 %v2163, %v2159
    %v2308 = vpack.c.b16 %v2168, %v2164
    %v2309 = vpack.c.b16 %v2169, %v2165
    %v2310 = vpack.c.b16 %v2170, %v2166
    %v2311 = vpack.c.b16 %v2171, %v2167
    %v2312 = vpack.c.b16 %v2176, %v2172
    %v2313 = vpack.c.b16 %v2177, %v2173
    %v2314 = vpack.c.b16 %v2178, %v2174
    %v2315 = vpack.c.b16 %v2179, %v2175
    %v2316 = vpack.c.b16 %v2184, %v2180
    %v2317 = vpack.c.b16 %v2185, %v2181
    %v2318 = vpack.c.b16 %v2186, %v2182
    %v2319 = vpack.c.b16 %v2187, %v2183
    %v2320 = vpack.c.b16 %v2192, %v2188
    %v2321 = vpack.c.b16 %v2193, %v2189
    %v2322 = vpack.c.b16 %v2194, %v2190
    %v2323 = vpack.c.b16 %v2195, %v2191
    %2452 = vmatprep.subr.bf16.mxu0 %v2197
    %2453 = vmatpush1.bf16.msra.mxu0 %v2196
    %2454 = vmatprep.subr.bf16.mxu0 %v2201
    %2455 = vmatpush1.bf16.msra.mxu0 %v2200
    %2456 = vmatprep.subr.bf16.mxu0 %v2205
    %2457 = vmatpush1.bf16.msra.mxu0 %v2204
    %2458 = vmatprep.subr.bf16.mxu0 %v2209
    %2459 = vmatpush1.bf16.msra.mxu0 %v2208
    %2460 = vmatprep.subr.bf16.mxu0 %v2213
    %2461 = vmatpush1.bf16.msra.mxu0 %v2212
    %2462 = vmatprep.subr.bf16.mxu0 %v2217
    %2463 = vmatpush1.bf16.msra.mxu0 %v2216
    %2464 = vmatprep.subr.bf16.mxu0 %v2221
    %2465 = vmatpush1.bf16.msra.mxu0 %v2220
    %2466 = vmatprep.subr.bf16.mxu0 %v2225
    %2467 = vmatpush1.bf16.msra.mxu0 %v2224
    %2468 = vmatprep.subr.bf16.mxu0 %v2229
    %2469 = vmatpush1.bf16.msra.mxu0 %v2228
    %2470 = vmatprep.subr.bf16.mxu0 %v2233
    %2471 = vmatpush1.bf16.msra.mxu0 %v2232
    %2472 = vmatprep.subr.bf16.mxu0 %v2237
    %2473 = vmatpush1.bf16.msra.mxu0 %v2236
    %2474 = vmatprep.subr.bf16.mxu0 %v2241
    %2475 = vmatpush1.bf16.msra.mxu0 %v2240
    %2476 = vmatprep.subr.bf16.mxu0 %v2245
    %2477 = vmatpush1.bf16.msra.mxu0 %v2244
    %2478 = vmatprep.subr.bf16.mxu0 %v2249
    %2479 = vmatpush1.bf16.msra.mxu0 %v2248
    %2480 = vmatprep.subr.bf16.mxu0 %v2253
    %2481 = vmatpush1.bf16.msra.mxu0 %v2252
    %2482 = vmatprep.subr.bf16.mxu0 %v2257
    %2483 = vmatpush1.bf16.msra.mxu0 %v2256
    %2484 = vmatprep.mubr.bf16.mxu0 %v1659
    %2485 = vmatmul.mubr.bf16.gmra.mrb[0].mxu0 %v1658
    %v2486 = vpop.f32.mrb[0].mxu0
    %v2487 = vadd.f32 %v1795, %v2486
    %v2488 = vpop.f32.mrb[0].mxu0
    %v2489 = vadd.f32 %v1799, %v2488
    %v2490 = vpop.f32.mrb[0].mxu0
    %v2491 = vadd.f32 %v1795, %v2490
    %v2492 = vpop.f32.mrb[0].mxu0
    %v2493 = vadd.f32 %v1799, %v2492
    %2494 = vdwg.mxu0
    %2495 = vmatprep.subr.bf16.mxu0 %v2261
    %2496 = vmatpush1.bf16.msra.mxu0 %v2260
    %2497 = vmatprep.subr.bf16.mxu0 %v2265
    %2498 = vmatpush1.bf16.msra.mxu0 %v2264
    %2499 = vmatprep.subr.bf16.mxu0 %v2269
    %2500 = vmatpush1.bf16.msra.mxu0 %v2268
    %2501 = vmatprep.subr.bf16.mxu0 %v2273
    %2502 = vmatpush1.bf16.msra.mxu0 %v2272
    %2503 = vmatprep.subr.bf16.mxu0 %v2277
    %2504 = vmatpush1.bf16.msra.mxu0 %v2276
    %2505 = vmatprep.subr.bf16.mxu0 %v2281
    %2506 = vmatpush1.bf16.msra.mxu0 %v2280
    %2507 = vmatprep.subr.bf16.mxu0 %v2285
    %2508 = vmatpush1.bf16.msra.mxu0 %v2284
    %2509 = vmatprep.subr.bf16.mxu0 %v2289
    %2510 = vmatpush1.bf16.msra.mxu0 %v2288
    %2511 = vmatprep.subr.bf16.mxu0 %v2293
    %2512 = vmatpush1.bf16.msra.mxu0 %v2292
    %2513 = vmatprep.subr.bf16.mxu0 %v2297
    %2514 = vmatpush1.bf16.msra.mxu0 %v2296
    %2515 = vmatprep.subr.bf16.mxu0 %v2301
    %2516 = vmatpush1.bf16.msra.mxu0 %v2300
    %2517 = vmatprep.subr.bf16.mxu0 %v2305
    %2518 = vmatpush1.bf16.msra.mxu0 %v2304
    %2519 = vmatprep.subr.bf16.mxu0 %v2309
    %2520 = vmatpush1.bf16.msra.mxu0 %v2308
    %2521 = vmatprep.subr.bf16.mxu0 %v2313
    %2522 = vmatpush1.bf16.msra.mxu0 %v2312
    %2523 = vmatprep.subr.bf16.mxu0 %v2317
    %2524 = vmatpush1.bf16.msra.mxu0 %v2316
    %2525 = vmatprep.subr.bf16.mxu0 %v2321
    %2526 = vmatpush1.bf16.msra.mxu0 %v2320
    %2527 = vmatprep.mubr.bf16.mxu0 %v1661
    %2528 = vmatmul.mubr.bf16.gmra.mrb[0].mxu0 %v1660
    %v2529 = vpop.f32.mrb[0].mxu0
    %v2530 = vadd.f32 %v2487, %v2529
    %v2531 = vpop.f32.mrb[0].mxu0
    %v2532 = vadd.f32 %v2489, %v2531
    %v2533 = vpop.f32.mrb[0].mxu0
    %v2534 = vadd.f32 %v2491, %v2533
    %v2535 = vpop.f32.mrb[0].mxu0
    %v2536 = vadd.f32 %v2493, %v2535
    %2537 = vdwg.mxu0
    %2538 = vmatprep.subr.bf16.mxu0 %v2199
    %2539 = vmatpush1.bf16.msra.mxu0 %v2198
    %2540 = vmatprep.subr.bf16.mxu0 %v2203
    %2541 = vmatpush1.bf16.msra.mxu0 %v2202
    %2542 = vmatprep.subr.bf16.mxu0 %v2207
    %2543 = vmatpush1.bf16.msra.mxu0 %v2206
    %2544 = vmatprep.subr.bf16.mxu0 %v2211
    %2545 = vmatpush1.bf16.msra.mxu0 %v2210
    %2546 = vmatprep.subr.bf16.mxu0 %v2215
    %2547 = vmatpush1.bf16.msra.mxu0 %v2214
    %2548 = vmatprep.subr.bf16.mxu0 %v2219
    %2549 = vmatpush1.bf16.msra.mxu0 %v2218
    %2550 = vmatprep.subr.bf16.mxu0 %v2223
    %2551 = vmatpush1.bf16.msra.mxu0 %v2222
    %2552 = vmatprep.subr.bf16.mxu0 %v2227
    %2553 = vmatpush1.bf16.msra.mxu0 %v2226
    %2554 = vmatprep.subr.bf16.mxu0 %v2231
    %2555 = vmatpush1.bf16.msra.mxu0 %v2230
    %2556 = vmatprep.subr.bf16.mxu0 %v2235
    %2557 = vmatpush1.bf16.msra.mxu0 %v2234
    %2558 = vmatprep.subr.bf16.mxu0 %v2239
    %2559 = vmatpush1.bf16.msra.mxu0 %v2238
    %2560 = vmatprep.subr.bf16.mxu0 %v2243
    %2561 = vmatpush1.bf16.msra.mxu0 %v2242
    %2562 = vmatprep.subr.bf16.mxu0 %v2247
    %2563 = vmatpush1.bf16.msra.mxu0 %v2246
    %2564 = vmatprep.subr.bf16.mxu0 %v2251
    %2565 = vmatpush1.bf16.msra.mxu0 %v2250
    %2566 = vmatprep.subr.bf16.mxu0 %v2255
    %2567 = vmatpush1.bf16.msra.mxu0 %v2254
    %2568 = vmatprep.subr.bf16.mxu0 %v2259
    %2569 = vmatpush1.bf16.msra.mxu0 %v2258
    %2570 = vmatprep.mubr.bf16.mxu0 %v1659
    %2571 = vmatmul.mubr.bf16.gmra.mrb[0].mxu0 %v1658
    %v2572 = vpop.f32.mrb[0].mxu0
    %v2573 = vadd.f32 %v1803, %v2572
    %v2574 = vpop.f32.mrb[0].mxu0
    %v2575 = vadd.f32 %v1807, %v2574
    %v2576 = vpop.f32.mrb[0].mxu0
    %v2577 = vadd.f32 %v1803, %v2576
    %v2578 = vpop.f32.mrb[0].mxu0
    %v2579 = vadd.f32 %v1807, %v2578
    %2580 = vdwg.mxu0
    %2581 = vmatprep.subr.bf16.mxu0 %v2263
    %2582 = vmatpush1.bf16.msra.mxu0 %v2262
    %2583 = vmatprep.subr.bf16.mxu0 %v2267
    %2584 = vmatpush1.bf16.msra.mxu0 %v2266
    %2585 = vmatprep.subr.bf16.mxu0 %v2271
    %2586 = vmatpush1.bf16.msra.mxu0 %v2270
    %2587 = vmatprep.subr.bf16.mxu0 %v2275
    %2588 = vmatpush1.bf16.msra.mxu0 %v2274
    %2589 = vmatprep.subr.bf16.mxu0 %v2279
    %2590 = vmatpush1.bf16.msra.mxu0 %v2278
    %2591 = vmatprep.subr.bf16.mxu0 %v2283
    %2592 = vmatpush1.bf16.msra.mxu0 %v2282
    %2593 = vmatprep.subr.bf16.mxu0 %v2287
    %2594 = vmatpush1.bf16.msra.mxu0 %v2286
    %2595 = vmatprep.subr.bf16.mxu0 %v2291
    %2596 = vmatpush1.bf16.msra.mxu0 %v2290
    %2597 = vmatprep.subr.bf16.mxu0 %v2295
    %2598 = vmatpush1.bf16.msra.mxu0 %v2294
    %2599 = vmatprep.subr.bf16.mxu0 %v2299
    %2600 = vmatpush1.bf16.msra.mxu0 %v2298
    %2601 = vmatprep.subr.bf16.mxu0 %v2303
    %2602 = vmatpush1.bf16.msra.mxu0 %v2302
    %2603 = vmatprep.subr.bf16.mxu0 %v2307
    %2604 = vmatpush1.bf16.msra.mxu0 %v2306
    %2605 = vmatprep.subr.bf16.mxu0 %v2311
    %2606 = vmatpush1.bf16.msra.mxu0 %v2310
    %2607 = vmatprep.subr.bf16.mxu0 %v2315
    %2608 = vmatpush1.bf16.msra.mxu0 %v2314
    %2609 = vmatprep.subr.bf16.mxu0 %v2319
    %2610 = vmatpush1.bf16.msra.mxu0 %v2318
    %2611 = vmatprep.subr.bf16.mxu0 %v2323
    %2612 = vmatpush1.bf16.msra.mxu0 %v2322
    %2613 = vmatprep.mubr.bf16.mxu0 %v1661
    %2614 = vmatmul.mubr.bf16.gmra.mrb[0].mxu0 %v1660
    %v2615 = vpop.f32.mrb[0].mxu0
    %v2616 = vadd.f32 %v2573, %v2615
    %v2617 = vpop.f32.mrb[0].mxu0
    %v2618 = vadd.f32 %v2575, %v2617
    %v2619 = vpop.f32.mrb[0].mxu0
    %v2620 = vadd.f32 %v2577, %v2619
    %v2621 = vpop.f32.mrb[0].mxu0
    %v2622 = vadd.f32 %v2579, %v2621
    %2623 = vdwg.mxu0
    %v2624 = vmax.f32 %v2530, 0.0
    %v2625 = vmax.f32 %v2532, 0.0
    %v2626 = vmax.f32 %v2616, 0.0
    %v2627 = vmax.f32 %v2618, 0.0
    %v2628 = vmax.f32 %v2534, 0.0
    %v2629 = vmax.f32 %v2536, 0.0
    %v2630 = vmax.f32 %v2620, 0.0
    %v2631 = vmax.f32 %v2622, 0.0
    %v2632 = vpack.c.bf16 %v2628, %v2624
    %v2633 = vpack.c.bf16 %v2629, %v2625
    %v2634 = vpack.c.bf16 %v2630, %v2626
    %v2635 = vpack.c.bf16 %v2631, %v2627
    %v2636 = vld [vmem:[#allocation8] sm:$0xf]
    %v2637 = vld [vmem:[#allocation8 + $0x4] sm:$0xf]
    %v2638 = vld [vmem:[#allocation8 + $0x8] sm:$0xf]
    %v2639 = vld [vmem:[#allocation8 + $0xc] sm:$0xf]
    %v2640 = vld [vmem:[#allocation8 + $0x10] sm:$0xf]
    %v2641 = vld [vmem:[#allocation8 + $0x14] sm:$0xf]
    %v2642 = vld [vmem:[#allocation8 + $0x18] sm:$0xf]
    %v2643 = vld [vmem:[#allocation8 + $0x1c] sm:$0xf]
    %v2644 = vld [vmem:[#allocation8 + $0x20] sm:$0xf]
    %v2645 = vld [vmem:[#allocation8 + $0x24] sm:$0xf]
    %v2646 = vld [vmem:[#allocation8 + $0x28] sm:$0xf]
    %v2647 = vld [vmem:[#allocation8 + $0x2c] sm:$0xf]
    %v2648 = vld [vmem:[#allocation8 + $0x30] sm:$0xf]
    %v2649 = vld [vmem:[#allocation8 + $0x34] sm:$0xf]
    %v2650 = vld [vmem:[#allocation8 + $0x38] sm:$0xf]
    %v2651 = vld [vmem:[#allocation8 + $0x3c] sm:$0xf]
    %v2652 = vld [vmem:[#allocation8 + $0x40] sm:$0xf]
    %v2653 = vld [vmem:[#allocation8 + $0x44] sm:$0xf]
    %v2654 = vld [vmem:[#allocation8 + $0x48] sm:$0xf]
    %v2655 = vld [vmem:[#allocation8 + $0x4c] sm:$0xf]
    %v2656 = vld [vmem:[#allocation8 + $0x50] sm:$0xf]
    %v2657 = vld [vmem:[#allocation8 + $0x54] sm:$0xf]
    %v2658 = vld [vmem:[#allocation8 + $0x58] sm:$0xf]
    %v2659 = vld [vmem:[#allocation8 + $0x5c] sm:$0xf]
    %v2660 = vld [vmem:[#allocation8 + $0x60] sm:$0xf]
    %v2661 = vld [vmem:[#allocation8 + $0x64] sm:$0xf]
    %v2662 = vld [vmem:[#allocation8 + $0x68] sm:$0xf]
    %v2663 = vld [vmem:[#allocation8 + $0x6c] sm:$0xf]
    %v2664 = vld [vmem:[#allocation8 + $0x70] sm:$0xf]
    %v2665 = vld [vmem:[#allocation8 + $0x74] sm:$0xf]
    %v2666 = vld [vmem:[#allocation8 + $0x78] sm:$0xf]
    %v2667 = vld [vmem:[#allocation8 + $0x7c] sm:$0xf]
    %v2668 = vld [vmem:[#allocation8 + $0x80] sm:$0xf]
    %v2669 = vld [vmem:[#allocation8 + $0x84] sm:$0xf]
    %v2670 = vld [vmem:[#allocation8 + $0x88] sm:$0xf]
    %v2671 = vld [vmem:[#allocation8 + $0x8c] sm:$0xf]
    %v2672 = vld [vmem:[#allocation8 + $0x90] sm:$0xf]
    %v2673 = vld [vmem:[#allocation8 + $0x94] sm:$0xf]
    %v2674 = vld [vmem:[#allocation8 + $0x98] sm:$0xf]
    %v2675 = vld [vmem:[#allocation8 + $0x9c] sm:$0xf]
    %v2676 = vld [vmem:[#allocation8 + $0xa0] sm:$0xf]
    %v2677 = vld [vmem:[#allocation8 + $0xa4] sm:$0xf]
    %v2678 = vld [vmem:[#allocation8 + $0xa8] sm:$0xf]
    %v2679 = vld [vmem:[#allocation8 + $0xac] sm:$0xf]
    %v2680 = vld [vmem:[#allocation8 + $0xb0] sm:$0xf]
    %v2681 = vld [vmem:[#allocation8 + $0xb4] sm:$0xf]
    %v2682 = vld [vmem:[#allocation8 + $0xb8] sm:$0xf]
    %v2683 = vld [vmem:[#allocation8 + $0xbc] sm:$0xf]
    %v2684 = vld [vmem:[#allocation8 + $0xc0] sm:$0xf]
    %v2685 = vld [vmem:[#allocation8 + $0xc4] sm:$0xf]
    %v2686 = vld [vmem:[#allocation8 + $0xc8] sm:$0xf]
    %v2687 = vld [vmem:[#allocation8 + $0xcc] sm:$0xf]
    %v2688 = vld [vmem:[#allocation8 + $0xd0] sm:$0xf]
    %v2689 = vld [vmem:[#allocation8 + $0xd4] sm:$0xf]
    %v2690 = vld [vmem:[#allocation8 + $0xd8] sm:$0xf]
    %v2691 = vld [vmem:[#allocation8 + $0xdc] sm:$0xf]
    %v2692 = vld [vmem:[#allocation8 + $0xe0] sm:$0xf]
    %v2693 = vld [vmem:[#allocation8 + $0xe4] sm:$0xf]
    %v2694 = vld [vmem:[#allocation8 + $0xe8] sm:$0xf]
    %v2695 = vld [vmem:[#allocation8 + $0xec] sm:$0xf]
    %v2696 = vld [vmem:[#allocation8 + $0xf0] sm:$0xf]
    %v2697 = vld [vmem:[#allocation8 + $0xf4] sm:$0xf]
    %v2698 = vld [vmem:[#allocation8 + $0xf8] sm:$0xf]
    %v2699 = vld [vmem:[#allocation8 + $0xfc] sm:$0xf]
    %v2700 = vld [vmem:[%s6] sm:$0x1]
    %v2702 = vlaneseq
    %v2703 = vshrl.u32 %v2702, 7
    %v2704 = vsub.s32 0, %v2703
    %v2705 = vrot.slane %v2700, %v2704
    %v2771 = vunpack.c.l.b16 %v2636
    %v2772 = vunpack.c.l.b16 %v2637
    %v2773 = vunpack.c.l.b16 %v2638
    %v2774 = vunpack.c.l.b16 %v2639
    %v2775 = vunpack.c.l.b16 %v2640
    %v2776 = vunpack.c.l.b16 %v2641
    %v2777 = vunpack.c.l.b16 %v2642
    %v2778 = vunpack.c.l.b16 %v2643
    %v2779 = vunpack.c.l.b16 %v2644
    %v2780 = vunpack.c.l.b16 %v2645
    %v2781 = vunpack.c.l.b16 %v2646
    %v2782 = vunpack.c.l.b16 %v2647
    %v2783 = vunpack.c.l.b16 %v2648
    %v2784 = vunpack.c.l.b16 %v2649
    %v2785 = vunpack.c.l.b16 %v2650
    %v2786 = vunpack.c.l.b16 %v2651
    %v2787 = vunpack.c.l.b16 %v2652
    %v2788 = vunpack.c.l.b16 %v2653
    %v2789 = vunpack.c.l.b16 %v2654
    %v2790 = vunpack.c.l.b16 %v2655
    %v2791 = vunpack.c.l.b16 %v2656
    %v2792 = vunpack.c.l.b16 %v2657
    %v2793 = vunpack.c.l.b16 %v2658
    %v2794 = vunpack.c.l.b16 %v2659
    %v2795 = vunpack.c.l.b16 %v2660
    %v2796 = vunpack.c.l.b16 %v2661
    %v2797 = vunpack.c.l.b16 %v2662
    %v2798 = vunpack.c.l.b16 %v2663
    %v2799 = vunpack.c.l.b16 %v2664
    %v2800 = vunpack.c.l.b16 %v2665
    %v2801 = vunpack.c.l.b16 %v2666
    %v2802 = vunpack.c.l.b16 %v2667
    %v2803 = vunpack.c.l.b16 %v2668
    %v2804 = vunpack.c.l.b16 %v2669
    %v2805 = vunpack.c.l.b16 %v2670
    %v2806 = vunpack.c.l.b16 %v2671
    %v2807 = vunpack.c.l.b16 %v2672
    %v2808 = vunpack.c.l.b16 %v2673
    %v2809 = vunpack.c.l.b16 %v2674
    %v2810 = vunpack.c.l.b16 %v2675
    %v2811 = vunpack.c.l.b16 %v2676
    %v2812 = vunpack.c.l.b16 %v2677
    %v2813 = vunpack.c.l.b16 %v2678
    %v2814 = vunpack.c.l.b16 %v2679
    %v2815 = vunpack.c.l.b16 %v2680
    %v2816 = vunpack.c.l.b16 %v2681
    %v2817 = vunpack.c.l.b16 %v2682
    %v2818 = vunpack.c.l.b16 %v2683
    %v2819 = vunpack.c.l.b16 %v2684
    %v2820 = vunpack.c.l.b16 %v2685
    %v2821 = vunpack.c.l.b16 %v2686
    %v2822 = vunpack.c.l.b16 %v2687
    %v2823 = vunpack.c.l.b16 %v2688
    %v2824 = vunpack.c.l.b16 %v2689
    %v2825 = vunpack.c.l.b16 %v2690
    %v2826 = vunpack.c.l.b16 %v2691
    %v2827 = vunpack.c.l.b16 %v2692
    %v2828 = vunpack.c.l.b16 %v2693
    %v2829 = vunpack.c.l.b16 %v2694
    %v2830 = vunpack.c.l.b16 %v2695
    %v2831 = vunpack.c.l.b16 %v2696
    %v2832 = vunpack.c.l.b16 %v2697
    %v2833 = vunpack.c.l.b16 %v2698
    %v2834 = vunpack.c.l.b16 %v2699
    %v2835 = vpack.c.b16 %v2772, %v2771
    %v2836 = vpack.c.b16 %v2774, %v2773
    %v2837 = vpack.c.b16 %v2776, %v2775
    %v2838 = vpack.c.b16 %v2778, %v2777
    %v2839 = vpack.c.b16 %v2780, %v2779
    %v2840 = vpack.c.b16 %v2782, %v2781
    %v2841 = vpack.c.b16 %v2784, %v2783
    %v2842 = vpack.c.b16 %v2786, %v2785
    %v2843 = vpack.c.b16 %v2788, %v2787
    %v2844 = vpack.c.b16 %v2790, %v2789
    %v2845 = vpack.c.b16 %v2792, %v2791
    %v2846 = vpack.c.b16 %v2794, %v2793
    %v2847 = vpack.c.b16 %v2796, %v2795
    %v2848 = vpack.c.b16 %v2798, %v2797
    %v2849 = vpack.c.b16 %v2800, %v2799
    %v2850 = vpack.c.b16 %v2802, %v2801
    %v2851 = vpack.c.b16 %v2804, %v2803
    %v2852 = vpack.c.b16 %v2806, %v2805
    %v2853 = vpack.c.b16 %v2808, %v2807
    %v2854 = vpack.c.b16 %v2810, %v2809
    %v2855 = vpack.c.b16 %v2812, %v2811
    %v2856 = vpack.c.b16 %v2814, %v2813
    %v2857 = vpack.c.b16 %v2816, %v2815
    %v2858 = vpack.c.b16 %v2818, %v2817
    %v2859 = vpack.c.b16 %v2820, %v2819
    %v2860 = vpack.c.b16 %v2822, %v2821
    %v2861 = vpack.c.b16 %v2824, %v2823
    %v2862 = vpack.c.b16 %v2826, %v2825
    %v2863 = vpack.c.b16 %v2828, %v2827
    %v2864 = vpack.c.b16 %v2830, %v2829
    %v2865 = vpack.c.b16 %v2832, %v2831
    %v2866 = vpack.c.b16 %v2834, %v2833
    %2899 = vmatprep.subr.bf16.mxu0 0
    %2900 = vmatpush1.bf16.msra.mxu0 %v2835
    %2901 = vmatprep.subr.bf16.mxu0 0
    %2902 = vmatpush1.bf16.msra.mxu0 %v2836
    %2903 = vmatprep.subr.bf16.mxu0 0
    %2904 = vmatpush1.bf16.msra.mxu0 %v2837
    %2905 = vmatprep.subr.bf16.mxu0 0
    %2906 = vmatpush1.bf16.msra.mxu0 %v2838
    %2907 = vmatprep.subr.bf16.mxu0 0
    %2908 = vmatpush1.bf16.msra.mxu0 %v2839
    %2909 = vmatprep.subr.bf16.mxu0 0
    %2910 = vmatpush1.bf16.msra.mxu0 %v2840
    %2911 = vmatprep.subr.bf16.mxu0 0
    %2912 = vmatpush1.bf16.msra.mxu0 %v2841
    %2913 = vmatprep.subr.bf16.mxu0 0
    %2914 = vmatpush1.bf16.msra.mxu0 %v2842
    %2915 = vmatprep.subr.bf16.mxu0 0
    %2916 = vmatpush1.bf16.msra.mxu0 %v2843
    %2917 = vmatprep.subr.bf16.mxu0 0
    %2918 = vmatpush1.bf16.msra.mxu0 %v2844
    %2919 = vmatprep.subr.bf16.mxu0 0
    %2920 = vmatpush1.bf16.msra.mxu0 %v2845
    %2921 = vmatprep.subr.bf16.mxu0 0
    %2922 = vmatpush1.bf16.msra.mxu0 %v2846
    %2923 = vmatprep.subr.bf16.mxu0 0
    %2924 = vmatpush1.bf16.msra.mxu0 %v2847
    %2925 = vmatprep.subr.bf16.mxu0 0
    %2926 = vmatpush1.bf16.msra.mxu0 %v2848
    %2927 = vmatprep.subr.bf16.mxu0 0
    %2928 = vmatpush1.bf16.msra.mxu0 %v2849
    %2929 = vmatprep.subr.bf16.mxu0 0
    %2930 = vmatpush1.bf16.msra.mxu0 %v2850
    %2931 = vmatprep.mubr.bf16.mxu0 %v2633
    %2932 = vmatmul.mubr.bf16.gmra.mrb[0].mxu0 %v2632
    %v2933 = vpop.f32.mrb[0].mxu0
    %v2934 = vadd.f32 %v2705, %v2933
    %v2935 = vpop.f32.mrb[0].mxu0
    %v2936 = vpop.f32.mrb[0].mxu0
    %v2937 = vadd.f32 %v2705, %v2936
    %v2938 = vpop.f32.mrb[0].mxu0
    %2939 = vdwg.mxu0
    %2940 = vmatprep.subr.bf16.mxu0 0
    %2941 = vmatpush1.bf16.msra.mxu0 %v2851
    %2942 = vmatprep.subr.bf16.mxu0 0
    %2943 = vmatpush1.bf16.msra.mxu0 %v2852
    %2944 = vmatprep.subr.bf16.mxu0 0
    %2945 = vmatpush1.bf16.msra.mxu0 %v2853
    %2946 = vmatprep.subr.bf16.mxu0 0
    %2947 = vmatpush1.bf16.msra.mxu0 %v2854
    %2948 = vmatprep.subr.bf16.mxu0 0
    %2949 = vmatpush1.bf16.msra.mxu0 %v2855
    %2950 = vmatprep.subr.bf16.mxu0 0
    %2951 = vmatpush1.bf16.msra.mxu0 %v2856
    %2952 = vmatprep.subr.bf16.mxu0 0
    %2953 = vmatpush1.bf16.msra.mxu0 %v2857
    %2954 = vmatprep.subr.bf16.mxu0 0
    %2955 = vmatpush1.bf16.msra.mxu0 %v2858
    %2956 = vmatprep.subr.bf16.mxu0 0
    %2957 = vmatpush1.bf16.msra.mxu0 %v2859
    %2958 = vmatprep.subr.bf16.mxu0 0
    %2959 = vmatpush1.bf16.msra.mxu0 %v2860
    %2960 = vmatprep.subr.bf16.mxu0 0
    %2961 = vmatpush1.bf16.msra.mxu0 %v2861
    %2962 = vmatprep.subr.bf16.mxu0 0
    %2963 = vmatpush1.bf16.msra.mxu0 %v2862
    %2964 = vmatprep.subr.bf16.mxu0 0
    %2965 = vmatpush1.bf16.msra.mxu0 %v2863
    %2966 = vmatprep.subr.bf16.mxu0 0
    %2967 = vmatpush1.bf16.msra.mxu0 %v2864
    %2968 = vmatprep.subr.bf16.mxu0 0
    %2969 = vmatpush1.bf16.msra.mxu0 %v2865
    %2970 = vmatprep.subr.bf16.mxu0 0
    %2971 = vmatpush1.bf16.msra.mxu0 %v2866
    %2972 = vmatprep.mubr.bf16.mxu0 %v2635
    %2973 = vmatmul.mubr.bf16.gmra.mrb[0].mxu0 %v2634
    %v2974 = vpop.f32.mrb[0].mxu0
    %v2975 = vadd.f32 %v2934, %v2974
    %v2976 = vpop.f32.mrb[0].mxu0
    %v2977 = vpop.f32.mrb[0].mxu0
    %v2978 = vadd.f32 %v2937, %v2977
    %v2979 = vpop.f32.mrb[0].mxu0
    %2980 = vdwg.mxu0
    %2981 = vst [vmem:[#allocation10] sm:$0xff] %v2975
    %2982 = vst [vmem:[#allocation10 + $0x8] sm:$0xff] %v2978
    // Predicated region
    $region46: #{tpu_custom_call.1} parent=1 // pred_check
      _
    $region47: #{tpu_custom_call.1} parent=1 // pred_check_branch
      %2984 = sbr.rel (0) target = $region49
    $region48: #{tpu_custom_call.1} parent=1 // pred_region
      %s2986 = ssub.s32 256, 256
      %2987 = vsyncadd [#allocation4], %s2986
      %s2988 = sshll.u32 [#allocation10], 4
      %s2989 = int_to_ptr.vmem [resolvable:$true] %s2988
      %2994 = dma.vmem_to_hbm [thread:$0]  %s2989, 256, %s7, [#allocation4], 128, 128, 8
    $region49: #{tpu_custom_call.1} parent=1 // pred_fallthru
      _
    // Predicated region
    $region50: #{tpu_custom_call.1} parent=1 // pred_check
      _
    $region51: #{tpu_custom_call.1} parent=1 // pred_check_branch
      %2996 = sbr.rel (0) target = $region53
    $region52: #{tpu_custom_call.1} parent=1 // pred_region
      %2997 = dma.done [#allocation4], 256
    $region53: #{tpu_custom_call.1} parent=1 // pred_fallthru
      _
    %2998 = vsyncpa [#allocation3], 1
    %2999 = vsyncpa [#allocation6], 1
    %3000 = vsyncpa [#allocation9], 1
    %3001 = vsyncpa [#allocation4], 1

</llo_original>
